<compile_context>
chip_gen: v5e
topology: v5e:2x2
jax: 0.10.0
libtpu: 0.0.40
codegen_flags: <defaults>
</compile_context>

<pallas_src>
import functools

import jax
import jax.numpy as jnp
from jax.experimental import pallas as pl
from jax.experimental.pallas import tpu as pltpu


def _mhsa_kernel(x_ref, wqkv_ref, bqkv_ref, wo_ref, bo_ref, o_ref, *, num_heads):
    # x_ref block: (1, T, C) bf16; wqkv: (C, 3C) bf16; bqkv: (1, 3C) f32
    # wo: (C, C) bf16; bo: (1, C) f32
    T = x_ref.shape[1]
    C = x_ref.shape[2]
    H = num_heads
    D = C // H
    scale = 1.0 / (D ** 0.5)

    x = x_ref[0]                                                        # (T, C) bf16

    # Fused Q|K|V projection: one wide MXU matmul, f32 accumulation.
    qkv = jnp.dot(x, wqkv_ref[...],
                  preferred_element_type=jnp.float32) + bqkv_ref[...]   # (T, 3C) f32

    # Split heads without explicit transposes: keep (T, H, D) and let einsum
    # batch over H. Scale folded into Q while still in f32.
    q = (qkv[:, :C] * scale).reshape(T, H, D).astype(jnp.bfloat16)      # (T, H, D)
    k = qkv[:, C:2 * C].reshape(T, H, D).astype(jnp.bfloat16)           # (T, H, D)
    v = qkv[:, 2 * C:].reshape(T, H, D).astype(jnp.bfloat16)            # (T, H, D)

    # Scores: contract on D with heads batched (no explicit k transpose).
    s = jnp.einsum("qhd,khd->hqk", q, k,
                   preferred_element_type=jnp.float32)                  # (H, T, T) f32

    # Causal mask: keep lower triangle. Large finite negative (not -inf) so a
    # fully-masked row under future tiling/padding cannot produce NaN.
    row = jax.lax.broadcasted_iota(jnp.int32, (T, T), 0)
    col = jax.lax.broadcasted_iota(jnp.int32, (T, T), 1)
    s = jnp.where((row >= col)[None, :, :], s, -1e30)

    # Numerically-stable softmax; normalize with the EUP approx reciprocal
    # instead of a VPU divide.
    s = s - jnp.max(s, axis=-1, keepdims=True)
    e = jnp.exp(s)
    p = e * pl.reciprocal(jnp.sum(e, axis=-1, keepdims=True), approx=True)

    # P @ V with heads batched; output lands directly in (T, H, D) so the
    # head re-merge is a contiguous reshape (matches PyTorch's
    # transpose(1,2).view(B,T,C) column ordering).
    attn = jnp.einsum("hqk,khd->qhd", p.astype(jnp.bfloat16), v,
                      preferred_element_type=jnp.float32)               # (T, H, D) f32
    attn = attn.reshape(T, C).astype(jnp.bfloat16)                      # (T, C)

    # Output projection (full-C store).
    y = jnp.dot(attn, wo_ref[...],
                preferred_element_type=jnp.float32) + bo_ref[...]       # (T, C) f32
    o_ref[0] = y.astype(o_ref.dtype)


def masked_mhsa(x, params, num_heads):
    """x: (B, T, C) float32.  params: dict of PyTorch-convention Linear weights."""
    B, T, C = x.shape
    D = C // num_heads

    # Fuse Q|K|V weights into a single (C, 3C) operand, pre-transposed to
    # (in, out); cast MXU operands to bf16 (f32 accumulation in-kernel).
    wqkv = jnp.concatenate(
        [params["wq"].T, params["wk"].T, params["wv"].T], axis=1).astype(jnp.bfloat16)
    bqkv = jnp.concatenate(
        [params["bq"], params["bk"], params["bv"]]).reshape(1, 3 * C).astype(jnp.float32)
    wo = params["wo"].T.astype(jnp.bfloat16)
    bo = params["bo"].reshape(1, C).astype(jnp.float32)
    x_bf = x.astype(jnp.bfloat16)

    kernel = functools.partial(_mhsa_kernel, num_heads=num_heads)

    # Advisory cost estimate for the XLA scheduler.
    flops = B * (2 * T * C * 3 * C            # fused QKV projection
                 + 4 * num_heads * T * T * D  # scores + PV
                 + 2 * T * C * C)             # output projection
    transcendentals = B * num_heads * T * T   # exp (+ reciprocal)
    bytes_accessed = (x_bf.size * 2 + wqkv.size * 2 + wo.size * 2
                      + bqkv.size * 4 + bo.size * 4 + B * T * C * 4)

    x_spec = pl.BlockSpec((1, T, C), lambda b: (b, 0, 0))

    return pl.pallas_call(
        kernel,
        out_shape=jax.ShapeDtypeStruct((B, T, C), x.dtype),
        grid_spec=pltpu.PrefetchScalarGridSpec(
            num_scalar_prefetch=0,
            grid=(B,),
            in_specs=[x_spec,
                      pl.BlockSpec((C, 3 * C), lambda b: (0, 0)),   # fused QKV weight
                      pl.BlockSpec((1, 3 * C), lambda b: (0, 0)),   # fused QKV bias
                      pl.BlockSpec((C, C), lambda b: (0, 0)),       # out_proj weight
                      pl.BlockSpec((1, C), lambda b: (0, 0))],      # out_proj bias
            out_specs=x_spec,
        ),
        compiler_params=pltpu.CompilerParams(
            dimension_semantics=("parallel",),
            # Derived from block sizes with generous headroom; safe on all gens
            # (<= v7x 32 MiB scoped default).
            vmem_limit_bytes=32 * 1024 * 1024),
        cost_estimate=pl.CostEstimate(flops=flops,
                                      transcendentals=transcendentals,
                                      bytes_accessed=bytes_accessed),
    )(x_bf, wqkv, bqkv, wo, bo)


def _reference(x, params, num_heads):
    """Pure-JAX replica of the PyTorch forward.  Matmul operands are rounded
    through bf16 (values only, f32 math) to mirror the kernel's MXU inputs."""
    B, T, C = x.shape
    D = C // num_heads
    bf = lambda a: a.astype(jnp.bfloat16).astype(jnp.float32)

    def lin(z, w, b):
        return bf(z) @ bf(w).T + b

    q = lin(x, params["wq"], params["bq"]).reshape(B, T, num_heads, D).transpose(0, 2, 1, 3)
    k = lin(x, params["wk"], params["bk"]).reshape(B, T, num_heads, D).transpose(0, 2, 1, 3)
    v = lin(x, params["wv"], params["bv"]).reshape(B, T, num_heads, D).transpose(0, 2, 1, 3)
    s = jnp.einsum("bhtd,bhsd->bhts", bf(q), bf(k)) / (D ** 0.5)
    mask = jnp.tril(jnp.ones((T, T), dtype=bool))
    s = jnp.where(mask[None, None], s, -jnp.inf)
    w = jax.nn.softmax(s, axis=-1)
    out = jnp.einsum("bhts,bhsd->bhtd", bf(w), bf(v)).transpose(0, 2, 1, 3).reshape(B, T, C)
    return lin(out, params["wo"], params["bo"])


if __name__ == "__main__":
    B, T, C, H = 2, 8, 32, 4  # embed_dim=32, num_heads=4, head_dim=8

    key = jax.random.PRNGKey(0)
    keys = jax.random.split(key, 9)
    scale = 1.0 / (C ** 0.5)
    params = {
        "wq": jax.random.normal(keys[0], (C, C), jnp.float32) * scale,
        "bq": jax.random.normal(keys[1], (C,), jnp.float32) * 0.1,
        "wk": jax.random.normal(keys[2], (C, C), jnp.float32) * scale,
        "bk": jax.random.normal(keys[3], (C,), jnp.float32) * 0.1,
        "wv": jax.random.normal(keys[4], (C, C), jnp.float32) * scale,
        "bv": jax.random.normal(keys[5], (C,), jnp.float32) * 0.1,
        "wo": jax.random.normal(keys[6], (C, C), jnp.float32) * scale,
        "bo": jax.random.normal(keys[7], (C,), jnp.float32) * 0.1,
    }
    x = jax.random.normal(keys[8], (B, T, C), jnp.float32)

    out = masked_mhsa(x, params, H)
    out = jax.block_until_ready(out)

    ref = _reference(x, params, H)
    assert out.shape == (B, T, C)
    # Tolerance reflects bf16 MXU operands + approx reciprocal (f32 accumulation).
    assert jnp.allclose(out, ref, atol=3e-2, rtol=3e-2), "mismatch vs reference"
    print("KERNEL_OK")
</pallas_src>

<mosaic_0001>
module attributes {stable_mosaic.version = 11 : i64} {
  func.func @_mhsa_kernel(%arg0: i32, %arg1: memref<1x8x32xbf16, #tpu.memory_space<vmem>>, %arg2: memref<32x96xbf16, #tpu.memory_space<vmem>>, %arg3: memref<1x96xf32, #tpu.memory_space<vmem>>, %arg4: memref<32x32xbf16, #tpu.memory_space<vmem>>, %arg5: memref<1x32xf32, #tpu.memory_space<vmem>>, %arg6: memref<1x8x32xf32, #tpu.memory_space<vmem>>) attributes {dimension_semantics = [#tpu.dimension_semantics<parallel>], iteration_bounds = array<i64: 2>, scalar_prefetch = 0 : i64, scratch_operands = 0 : i64, tpu.core_type = #tpu.core_type<tc>, window_params = [{transform_indices = @transform_0, window_bounds = array<i64: 1, 8, 32>}, {pipeline_mode = #tpu.pipeline_mode<synchronous>, transform_indices = @transform_1, window_bounds = array<i64: 32, 96>}, {pipeline_mode = #tpu.pipeline_mode<synchronous>, transform_indices = @transform_2, window_bounds = array<i64: 1, 96>}, {pipeline_mode = #tpu.pipeline_mode<synchronous>, transform_indices = @transform_3, window_bounds = array<i64: 32, 32>}, {pipeline_mode = #tpu.pipeline_mode<synchronous>, transform_indices = @transform_4, window_bounds = array<i64: 1, 32>}, {transform_indices = @transform_5, window_bounds = array<i64: 1, 8, 32>}]} {
    %c0 = arith.constant 0 : index
    %c0_0 = arith.constant 0 : index
    %c0_1 = arith.constant 0 : index
    %0 = vector.load %arg1[%c0, %c0_0, %c0_1] : memref<1x8x32xbf16, #tpu.memory_space<vmem>>, vector<1x8x32xbf16>
    %1 = vector.shape_cast %0 : vector<1x8x32xbf16> to vector<8x32xbf16>
    %c0_2 = arith.constant 0 : index
    %c0_3 = arith.constant 0 : index
    %2 = vector.load %arg2[%c0_2, %c0_3] : memref<32x96xbf16, #tpu.memory_space<vmem>>, vector<32x96xbf16>
    %cst = arith.constant dense<0.000000e+00> : vector<8x96xf32>
    %3 = tpu.matmul %1, %2, %cst {dimension_numbers = #tpu.dot_dimension_numbers<[1], [0], [0], [1], [0, 0, 1, 1], [], []>} : vector<8x32xbf16>, vector<32x96xbf16>, vector<8x96xf32> -> vector<8x96xf32>
    %c0_4 = arith.constant 0 : index
    %c0_5 = arith.constant 0 : index
    %4 = vector.load %arg3[%c0_4, %c0_5] : memref<1x96xf32, #tpu.memory_space<vmem>>, vector<1x96xf32>
    %5 = vector.broadcast %4 : vector<1x96xf32> to vector<8x96xf32>
    %6 = arith.addf %3, %5 : vector<8x96xf32>
    %7 = vector.extract_strided_slice %6 {offsets = [0, 0], sizes = [8, 32], strides = [1, 1]} : vector<8x96xf32> to vector<8x32xf32>
    %cst_6 = arith.constant 0.353553385 : f32
    %8 = vector.broadcast %cst_6 : f32 to vector<8x32xf32>
    %9 = arith.mulf %7, %8 : vector<8x32xf32>
    %10 = vector.shape_cast %9 : vector<8x32xf32> to vector<8x4x8xf32>
    %11 = arith.truncf %10 : vector<8x4x8xf32> to vector<8x4x8xbf16>
    %12 = vector.extract_strided_slice %6 {offsets = [0, 32], sizes = [8, 32], strides = [1, 1]} : vector<8x96xf32> to vector<8x32xf32>
    %13 = vector.shape_cast %12 : vector<8x32xf32> to vector<8x4x8xf32>
    %14 = arith.truncf %13 : vector<8x4x8xf32> to vector<8x4x8xbf16>
    %15 = vector.extract_strided_slice %6 {offsets = [0, 64], sizes = [8, 32], strides = [1, 1]} : vector<8x96xf32> to vector<8x32xf32>
    %16 = vector.shape_cast %15 : vector<8x32xf32> to vector<8x4x8xf32>
    %17 = arith.truncf %16 : vector<8x4x8xf32> to vector<8x4x8xbf16>
    "tpu.trace_start"() <{level = 10 : i32, message = "qhd,khd->hqk"}> : () -> ()
    %cst_7 = arith.constant dense<0.000000e+00> : vector<4x8x8xf32>
    %18 = tpu.matmul %11, %14, %cst_7 {dimension_numbers = #tpu.dot_dimension_numbers<[2], [2], [0], [0], [0, 1, 0, 0, 1, 0], [1], [1]>} : vector<8x4x8xbf16>, vector<8x4x8xbf16>, vector<4x8x8xf32> -> vector<4x8x8xf32>
    "tpu.trace_stop"() : () -> ()
    %19 = tpu.iota {dimensions = array<i32: 0>} : vector<8x8xi32>
    %20 = tpu.iota {dimensions = array<i32: 1>} : vector<8x8xi32>
    %21 = arith.cmpi sge, %19, %20 : vector<8x8xi32>
    %22 = vector.shape_cast %21 : vector<8x8xi1> to vector<1x8x8xi1>
    %cst_8 = arith.constant -1.000000e+30 : f32
    %23 = vector.shape_cast %22 : vector<1x8x8xi1> to vector<1x8x8xi1>
    %24 = vector.broadcast %23 : vector<1x8x8xi1> to vector<4x8x8xi1>
    %25 = vector.broadcast %cst_8 : f32 to vector<4x8x8xf32>
    %26 = arith.select %24, %18, %25 : vector<4x8x8xi1>, vector<4x8x8xf32>
    %cst_9 = arith.constant dense<0xFF800000> : vector<4x8xf32>
    %27 = vector.multi_reduction <maximumf>, %26, %cst_9 [2] : vector<4x8x8xf32> to vector<4x8xf32>
    %28 = vector.shape_cast %27 : vector<4x8xf32> to vector<4x8x1xf32>
    %29 = vector.broadcast %28 : vector<4x8x1xf32> to vector<4x8x8xf32>
    %30 = arith.subf %26, %29 : vector<4x8x8xf32>
    %31 = math.exp %30 : vector<4x8x8xf32>
    %cst_10 = arith.constant dense<0.000000e+00> : vector<4x8xf32>
    %32 = vector.multi_reduction <add>, %31, %cst_10 [2] : vector<4x8x8xf32> to vector<4x8xf32>
    %33 = vector.shape_cast %32 : vector<4x8xf32> to vector<4x8x1xf32>
    %34 = tpu.reciprocal %33 {approx = true} : vector<4x8x1xf32> -> vector<4x8x1xf32>
    %35 = vector.broadcast %34 : vector<4x8x1xf32> to vector<4x8x8xf32>
    %36 = arith.mulf %31, %35 : vector<4x8x8xf32>
    %37 = arith.truncf %36 : vector<4x8x8xf32> to vector<4x8x8xbf16>
    "tpu.trace_start"() <{level = 10 : i32, message = "hqk,khd->qhd"}> : () -> ()
    %cst_11 = arith.constant dense<0.000000e+00> : vector<4x8x8xf32>
    %38 = tpu.matmul %17, %37, %cst_11 {dimension_numbers = #tpu.dot_dimension_numbers<[0], [2], [2], [1], [0, 1, 0, 2, 1, 1], [1], [0]>} : vector<8x4x8xbf16>, vector<4x8x8xbf16>, vector<4x8x8xf32> -> vector<4x8x8xf32>
    %39 = tpu.transpose %38, [2, 0, 1] : vector<4x8x8xf32> -> vector<8x4x8xf32>
    "tpu.trace_stop"() : () -> ()
    %40 = vector.shape_cast %39 : vector<8x4x8xf32> to vector<8x32xf32>
    %41 = arith.truncf %40 : vector<8x32xf32> to vector<8x32xbf16>
    %c0_12 = arith.constant 0 : index
    %c0_13 = arith.constant 0 : index
    %42 = vector.load %arg4[%c0_12, %c0_13] : memref<32x32xbf16, #tpu.memory_space<vmem>>, vector<32x32xbf16>
    %cst_14 = arith.constant dense<0.000000e+00> : vector<8x32xf32>
    %43 = tpu.matmul %41, %42, %cst_14 {dimension_numbers = #tpu.dot_dimension_numbers<[1], [0], [0], [1], [0, 0, 1, 1], [], []>} : vector<8x32xbf16>, vector<32x32xbf16>, vector<8x32xf32> -> vector<8x32xf32>
    %c0_15 = arith.constant 0 : index
    %c0_16 = arith.constant 0 : index
    %44 = vector.load %arg5[%c0_15, %c0_16] : memref<1x32xf32, #tpu.memory_space<vmem>>, vector<1x32xf32>
    %45 = vector.broadcast %44 : vector<1x32xf32> to vector<8x32xf32>
    %46 = arith.addf %43, %45 : vector<8x32xf32>
    %c0_17 = arith.constant 0 : index
    %c0_18 = arith.constant 0 : index
    %c0_19 = arith.constant 0 : index
    %47 = vector.load %arg6[%c0_17, %c0_18, %c0_19] : memref<1x8x32xf32, #tpu.memory_space<vmem>>, vector<1x8x32xf32>
    %48 = vector.shape_cast %47 : vector<1x8x32xf32> to vector<8x32xf32>
    %49 = vector.shape_cast %46 : vector<8x32xf32> to vector<1x8x32xf32>
    tpu.vector_store %arg6[%c0_17, %c0_18, %c0_19], %49 {strides = array<i32>} : memref<1x8x32xf32, #tpu.memory_space<vmem>>, vector<1x8x32xf32>,
    return
  }
  func.func @transform_0(%arg0: i32) -> (i32, i32, i32) {
    %c0_i32 = arith.constant 0 : i32
    %c0_i32_0 = arith.constant 0 : i32
    %c0_i32_1 = arith.constant 0 : i32
    return %arg0, %c0_i32, %c0_i32_0 : i32, i32, i32
  }
  func.func @transform_1(%arg0: i32) -> (i32, i32) {
    %c0_i32 = arith.constant 0 : i32
    %c0_i32_0 = arith.constant 0 : i32
    %c0_i32_1 = arith.constant 0 : i32
    return %c0_i32, %c0_i32_0 : i32, i32
  }
  func.func @transform_2(%arg0: i32) -> (i32, i32) {
    %c0_i32 = arith.constant 0 : i32
    %c0_i32_0 = arith.constant 0 : i32
    %c0_i32_1 = arith.constant 0 : i32
    return %c0_i32, %c0_i32_0 : i32, i32
  }
  func.func @transform_3(%arg0: i32) -> (i32, i32) {
    %c0_i32 = arith.constant 0 : i32
    %c0_i32_0 = arith.constant 0 : i32
    %c0_i32_1 = arith.constant 0 : i32
    return %c0_i32, %c0_i32_0 : i32, i32
  }
  func.func @transform_4(%arg0: i32) -> (i32, i32) {
    %c0_i32 = arith.constant 0 : i32
    %c0_i32_0 = arith.constant 0 : i32
    %c0_i32_1 = arith.constant 0 : i32
    return %c0_i32, %c0_i32_0 : i32, i32
  }
  func.func @transform_5(%arg0: i32) -> (i32, i32, i32) {
    %c0_i32 = arith.constant 0 : i32
    %c0_i32_0 = arith.constant 0 : i32
    %c0_i32_1 = arith.constant 0 : i32
    return %arg0, %c0_i32, %c0_i32_0 : i32, i32, i32
  }
}

</mosaic_0001>

<llo_original>
// kernel: tpu_custom_call.1
$region0: #{tpu_custom_call.1}
  #allocation0 [shape = 'u32[]', space=smem, size = 0x4, offset = 0x4, fixed_abs, tag = 'smem constant byte address 0x4 - core index']
  #allocation1 [shape = 'u32[72,128]{1,0:T(1,128)}', space=vmem, size = 0x9000, scoped, tag = 'internal scratch']
  %s0 = inlined_call_operand.hbm [shape: bf16[2,8,32], index: 0, kind: input, shape index: {}]
  %s1 = inlined_call_operand.hbm [shape: bf16[32,96], index: 1, kind: input, shape index: {}]
  %s2 = inlined_call_operand.vmem [shape: f32[1,96], index: 2, kind: input, shape index: {}]
  %s3 = inlined_call_operand.hbm [shape: bf16[32,32], index: 3, kind: input, shape index: {}]
  %s4 = inlined_call_operand.vmem [shape: f32[1,32], index: 4, kind: input, shape index: {}]
  %s5 = inlined_call_operand.hbm [shape: f32[2,8,32], index: 5, kind: output, shape index: {}]
  %s6 = sld [smem:[#allocation0]]
  $region65: #{tpu_custom_call.1} parent=0
    _
  %s8 = ssub.s32 1, %s6
  %s9 = scalar_select 0, %s8, %s6
  $region1: #{tpu_custom_call.1} parent=0
    #allocation2 [shape = 'u8[4096]{0}', space=vmem, size = 0x1000, scoped, tag = 'input window, operand 0']
    #allocation3 [shape = 's32[2]{0}', space=sflag, size = 0x8, scoped, tag = 'scoped memory for tpu_custom_call.1']
    #allocation4 [shape = 's32[2]{0}', space=sflag, size = 0x8, scoped, tag = 'scoped memory for tpu_custom_call.1']
    #allocation5 [shape = 'u8[8192]{0}', space=vmem, size = 0x2000, scoped, tag = 'input window, operand 1, single buffered']
    #allocation6 [shape = 's32[1]{0}', space=sflag, size = 0x4, scoped, tag = 'scoped memory for tpu_custom_call.1']
    #allocation7 [shape = 'u8[8192]{0}', space=vmem, size = 0x2000, scoped, tag = 'input window, operand 3, single buffered']
    #allocation8 [shape = 'u8[8192]{0}', space=vmem, size = 0x2000, scoped, tag = 'output window, operand 0']
    %10 = vsyncpa [#allocation3], 0
    %s11 = scalar_lea.sflag [#allocation3], 1
    %12 = vsyncpa %s11, 0
    %13 = vsyncpa [#allocation6], 0
    %14 = vsyncpa [#allocation4], 0
    %s15 = scalar_lea.sflag [#allocation4], 1
    %16 = vsyncpa %s15, 0
    loop: start=0, step=1, limit=4
    $region2: #{tpu_custom_call.1} parent=1 // loop_pre_header
      _
    $region3: #{tpu_custom_call.1} parent=1 // loop_header
      %s18 = sphi 0, %s22
      %p19 = scmp.ge.s32.totalorder %s18, 4
      %s28 = sphi 0, %s30
      %s31 = sphi 0, %s28
      %s32 = sphi 0, %s31
      %s48 = sphi 0, %s32
      %s52 = sphi 0, %s52
      %s54 = sphi 0, %s52
      %s55 = sphi 0, %s54
      %s69 = sphi 0, %s55
      %s73 = sphi 0, %s73
      %s75 = sphi 0, %s73
      %s76 = sphi 0, %s75
      %s90 = sphi 0, %s76
      %s94 = sphi 0, %s94
      %s96 = sphi 0, %s94
      %s97 = sphi 0, %s96
      %s111 = sphi 0, %s97
      %s115 = sphi 0, %s115
      %s117 = sphi 0, %s115
      %s118 = sphi 0, %s117
      %s132 = sphi 0, %s118
      %s138 = sphi 0, %s140
      %s141 = sphi 0, %s138
      %s142 = sphi 0, %s141
      %s158 = sphi 0, %s142
    $region4: #{tpu_custom_call.1} parent=1 // loop_header_branch
      %21 = sbr.rel (%p19) target = $region8
    $region5: #{tpu_custom_call.1} parent=1 // loop_body
      %s23 = ssub.s32 %s18, 1
      %s24 = ssub.s32 %s18, 2
      %s25 = sadd.s32 %s18, 1
      %s26 = ssub.s32 %s18, %s25
      %p27 = scmp.eq.s32.totalorder %s26, 0
      %s29 = sadd.s32 %s28, 1
      %s30 = scalar_select %p27, %s28, %s29
      %p33 = pneg %p27
      %p34 = scmp.eq.s32.totalorder %s18, 1
      %p35 = por %p33, %p34
      %p36 = scmp.ne.s32.totalorder %s28, %s31
      %p37 = scmp.eq.s32.totalorder %s18, 0
      %p38 = por %p36, %p37
      %p39 = scmp.ne.s32.totalorder %s28, %s31
      %p40 = scmp.eq.s32.totalorder %s23, 1
      %p41 = por %p39, %p40
      %p42 = scmp.ne.s32.totalorder %s31, %s32
      %p43 = scmp.eq.s32.totalorder %s23, 0
      %p44 = por %p42, %p43
      %p45 = scmp.ne.s32.totalorder %s31, %s32
      %p46 = scmp.eq.s32.totalorder %s24, 1
      %p47 = por %p45, %p46
      %p49 = scmp.ne.s32.totalorder %s32, %s48
      %p50 = scmp.eq.s32.totalorder %s24, 0
      %p51 = por %p49, %p50
      %s53 = sadd.s32 %s52, 1
      %p56 = scmp.eq.s32.totalorder %s18, 1
      %p57 = scmp.ne.s32.totalorder %s52, %s54
      %p58 = scmp.eq.s32.totalorder %s18, 0
      %p59 = por %p57, %p58
      %p60 = scmp.ne.s32.totalorder %s52, %s54
      %p61 = scmp.eq.s32.totalorder %s23, 1
      %p62 = por %p60, %p61
      %p63 = scmp.ne.s32.totalorder %s54, %s55
      %p64 = scmp.eq.s32.totalorder %s23, 0
      %p65 = por %p63, %p64
      %p66 = scmp.ne.s32.totalorder %s54, %s55
      %p67 = scmp.eq.s32.totalorder %s24, 1
      %p68 = por %p66, %p67
      %p70 = scmp.ne.s32.totalorder %s55, %s69
      %p71 = scmp.eq.s32.totalorder %s24, 0
      %p72 = por %p70, %p71
      %s74 = sadd.s32 %s73, 1
      %p77 = scmp.eq.s32.totalorder %s18, 1
      %p78 = scmp.ne.s32.totalorder %s73, %s75
      %p79 = scmp.eq.s32.totalorder %s18, 0
      %p80 = por %p78, %p79
      %p81 = scmp.ne.s32.totalorder %s73, %s75
      %p82 = scmp.eq.s32.totalorder %s23, 1
      %p83 = por %p81, %p82
      %p84 = scmp.ne.s32.totalorder %s75, %s76
      %p85 = scmp.eq.s32.totalorder %s23, 0
      %p86 = por %p84, %p85
      %p87 = scmp.ne.s32.totalorder %s75, %s76
      %p88 = scmp.eq.s32.totalorder %s24, 1
      %p89 = por %p87, %p88
      %p91 = scmp.ne.s32.totalorder %s76, %s90
      %p92 = scmp.eq.s32.totalorder %s24, 0
      %p93 = por %p91, %p92
      %s95 = sadd.s32 %s94, 1
      %p98 = scmp.eq.s32.totalorder %s18, 1
      %p99 = scmp.ne.s32.totalorder %s94, %s96
      %p100 = scmp.eq.s32.totalorder %s18, 0
      %p101 = por %p99, %p100
      %p102 = scmp.ne.s32.totalorder %s94, %s96
      %p103 = scmp.eq.s32.totalorder %s23, 1
      %p104 = por %p102, %p103
      %p105 = scmp.ne.s32.totalorder %s96, %s97
      %p106 = scmp.eq.s32.totalorder %s23, 0
      %p107 = por %p105, %p106
      %p108 = scmp.ne.s32.totalorder %s96, %s97
      %p109 = scmp.eq.s32.totalorder %s24, 1
      %p110 = por %p108, %p109
      %p112 = scmp.ne.s32.totalorder %s97, %s111
      %p113 = scmp.eq.s32.totalorder %s24, 0
      %p114 = por %p112, %p113
      %s116 = sadd.s32 %s115, 1
      %p119 = scmp.eq.s32.totalorder %s18, 1
      %p120 = scmp.ne.s32.totalorder %s115, %s117
      %p121 = scmp.eq.s32.totalorder %s18, 0
      %p122 = por %p120, %p121
      %p123 = scmp.ne.s32.totalorder %s115, %s117
      %p124 = scmp.eq.s32.totalorder %s23, 1
      %p125 = por %p123, %p124
      %p126 = scmp.ne.s32.totalorder %s117, %s118
      %p127 = scmp.eq.s32.totalorder %s23, 0
      %p128 = por %p126, %p127
      %p129 = scmp.ne.s32.totalorder %s117, %s118
      %p130 = scmp.eq.s32.totalorder %s24, 1
      %p131 = por %p129, %p130
      %p133 = scmp.ne.s32.totalorder %s118, %s132
      %p134 = scmp.eq.s32.totalorder %s24, 0
      %p135 = por %p133, %p134
      %s136 = ssub.s32 %s18, %s25
      %p137 = scmp.eq.s32.totalorder %s136, 0
      %s139 = sadd.s32 %s138, 1
      %s140 = scalar_select %p137, %s138, %s139
      %p143 = pneg %p137
      %p144 = scmp.eq.s32.totalorder %s18, 1
      %p145 = por %p143, %p144
      %p146 = scmp.ne.s32.totalorder %s138, %s141
      %p147 = scmp.eq.s32.totalorder %s18, 0
      %p148 = por %p146, %p147
      %p149 = scmp.ne.s32.totalorder %s138, %s141
      %p150 = scmp.eq.s32.totalorder %s23, 1
      %p151 = por %p149, %p150
      %p152 = scmp.ne.s32.totalorder %s141, %s142
      %p153 = scmp.eq.s32.totalorder %s23, 0
      %p154 = por %p152, %p153
      %p155 = scmp.ne.s32.totalorder %s141, %s142
      %p156 = scmp.eq.s32.totalorder %s24, 1
      %p157 = por %p155, %p156
      %p159 = scmp.ne.s32.totalorder %s142, %s158
      %p160 = scmp.eq.s32.totalorder %s24, 0
      %p161 = por %p159, %p160
      %p162 = scmp.le.s32.totalorder 1, %s18
      %p163 = scmp.lt.s32.totalorder %s18, 3
      %p164 = pnand %p162, %p163
      %p165 = pneg %p164
      // Predicated region
      $region9: #{tpu_custom_call.1} parent=5 // pred_check
        _
      $region10: #{tpu_custom_call.1} parent=5 // pred_check_branch
        %167 = sbr.rel (%p164) target = $region12
      $region11: #{tpu_custom_call.1} parent=5 // pred_region
        %s168 = ssub.s32 %s18, 1
        // Predicated region
        $region13: #{tpu_custom_call.1} parent=11 // pred_check
          %p169 = pneg %p65
        $region14: #{tpu_custom_call.1} parent=11 // pred_check_branch
          %171 = sbr.rel (%p169) target = $region16
        $region15: #{tpu_custom_call.1} parent=11 // pred_region
          %173 = vsyncadd [#allocation6], 0
          %s174 = sshll.u32 %s1, 4
          %s175 = int_to_ptr.hbm [resolvable:$true] %s174
          %s176 = sshll.u32 [#allocation5], 4
          %s177 = int_to_ptr.vmem [resolvable:$true] %s176
          %182 = dma.hbm_to_vmem [thread:$0]  %s175, 256, %s177, [#allocation6], 64, 64, 4
        $region16: #{tpu_custom_call.1} parent=11 // pred_fallthru
          _
        // Predicated region
        $region17: #{tpu_custom_call.1} parent=11 // pred_check
          %p183 = pneg %p86
        $region18: #{tpu_custom_call.1} parent=11 // pred_check_branch
          %185 = sbr.rel (%p183) target = $region20
        $region19: #{tpu_custom_call.1} parent=11 // pred_region
          _
        $region20: #{tpu_custom_call.1} parent=11 // pred_fallthru
          _
        // Predicated region
        $region21: #{tpu_custom_call.1} parent=11 // pred_check
          %p186 = pneg %p107
        $region22: #{tpu_custom_call.1} parent=11 // pred_check_branch
          %188 = sbr.rel (%p186) target = $region24
        $region23: #{tpu_custom_call.1} parent=11 // pred_region
          %190 = vsyncadd [#allocation6], 0
          %s191 = sshll.u32 %s3, 4
          %s192 = int_to_ptr.hbm [resolvable:$true] %s191
          %s193 = sshll.u32 [#allocation7], 4
          %s194 = int_to_ptr.vmem [resolvable:$true] %s193
          %199 = dma.hbm_to_vmem [thread:$0]  %s192, 256, %s194, [#allocation6], 64, 64, 4
        $region24: #{tpu_custom_call.1} parent=11 // pred_fallthru
          _
        // Predicated region
        $region25: #{tpu_custom_call.1} parent=11 // pred_check
          %p200 = pneg %p128
        $region26: #{tpu_custom_call.1} parent=11 // pred_check_branch
          %202 = sbr.rel (%p200) target = $region28
        $region27: #{tpu_custom_call.1} parent=11 // pred_region
          _
        $region28: #{tpu_custom_call.1} parent=11 // pred_fallthru
          _
      $region12: #{tpu_custom_call.1} parent=5 // pred_fallthru
        _
      %p203 = scmp.lt.s32.totalorder %s18, 2
      // Predicated region
      $region29: #{tpu_custom_call.1} parent=5 // pred_check
        %p204 = pneg %p203
      $region30: #{tpu_custom_call.1} parent=5 // pred_check_branch
        %206 = sbr.rel (%p204) target = $region32
      $region31: #{tpu_custom_call.1} parent=5 // pred_region
        // Predicated region
        $region33: #{tpu_custom_call.1} parent=31 // pred_check
          %p207 = pneg %p38
        $region34: #{tpu_custom_call.1} parent=31 // pred_check_branch
          %209 = sbr.rel (%p207) target = $region36
        $region35: #{tpu_custom_call.1} parent=31 // pred_region
          %s210 = sand.u32 %s28, 1
          %s211 = scalar_lea.sflag [#allocation3], %s210
          %s212 = sand.u32 %s28, 1
          %s213 = smul.addr %s212, 4
          %s214 = scalar_lea.vmem [#allocation2], %s213
          %216 = vsyncadd %s211, 0
          %s217 = smul.addr %s18, 4
          %s218 = scalar_lea.hbm %s0, %s217
          %s220 = sshll.u32 %s218, 4
          %s221 = int_to_ptr.hbm [resolvable:$true] %s220
          %s222 = sshll.u32 %s214, 4
          %s223 = int_to_ptr.vmem [resolvable:$true] %s222
          %225 = dma.hbm_to_vmem [thread:$0]  %s221, 64, %s223, %s211
        $region36: #{tpu_custom_call.1} parent=31 // pred_fallthru
          _
      $region32: #{tpu_custom_call.1} parent=5 // pred_fallthru
        _
      %p226 = scmp.le.s32.totalorder 1, %s18
      %p227 = scmp.lt.s32.totalorder %s18, 3
      %p228 = pnand %p226, %p227
      %p229 = pneg %p228
      // Predicated region
      $region37: #{tpu_custom_call.1} parent=5 // pred_check
        _
      $region38: #{tpu_custom_call.1} parent=5 // pred_check_branch
        %231 = sbr.rel (%p228) target = $region40
      $region39: #{tpu_custom_call.1} parent=5 // pred_region
        %s232 = ssub.s32 %s18, 1
        %s233 = sand.u32 %s31, 1
        %s234 = scalar_lea.sflag [#allocation3], %s233
        %s235 = sand.u32 %s31, 1
        %s236 = smul.addr %s235, 4
        %s237 = scalar_lea.vmem [#allocation2], %s236
        // Predicated region
        $region41: #{tpu_custom_call.1} parent=39 // pred_check
          %p238 = pneg %p44
        $region42: #{tpu_custom_call.1} parent=39 // pred_check_branch
          %240 = sbr.rel (%p238) target = $region44
        $region43: #{tpu_custom_call.1} parent=39 // pred_region
          %242 = dma.done %s234, 64
        $region44: #{tpu_custom_call.1} parent=39 // pred_fallthru
          _
        // Predicated region
        $region45: #{tpu_custom_call.1} parent=39 // pred_check
          %p243 = pneg %p65
        $region46: #{tpu_custom_call.1} parent=39 // pred_check_branch
          %245 = sbr.rel (%p243) target = $region48
        $region47: #{tpu_custom_call.1} parent=39 // pred_region
          %247 = dma.done [#allocation6], 256
        $region48: #{tpu_custom_call.1} parent=39 // pred_fallthru
          _
        // Predicated region
        $region49: #{tpu_custom_call.1} parent=39 // pred_check
          %p248 = pneg %p107
        $region50: #{tpu_custom_call.1} parent=39 // pred_check_branch
          %250 = sbr.rel (%p248) target = $region52
        $region51: #{tpu_custom_call.1} parent=39 // pred_region
          %252 = dma.done [#allocation6], 256
        $region52: #{tpu_custom_call.1} parent=39 // pred_fallthru
          _
        %s253 = sand.u32 %s31, 1
        %s254 = scalar_lea.sflag [#allocation3], %s253
        %s255 = sand.u32 %s31, 1
        %s256 = smul.addr %s255, 4
        %s257 = scalar_lea.vmem [#allocation2], %s256
        %p258 = pneg %p44
        %p259 = pneg %p41
        %p260 = pneg %p65
        %p261 = pneg %p62
        %p262 = pneg %p86
        %p263 = pneg %p83
        %p264 = pneg %p107
        %p265 = pneg %p104
        %p266 = pneg %p128
        %p267 = pneg %p125
        %p268 = pneg %p154
        %p269 = pneg %p151
        %s270 = sand.u32 %s141, 1
        %s271 = scalar_lea.sflag [#allocation4], %s270
        %s272 = sand.u32 %s141, 1
        %s273 = smul.addr %s272, 8
        %s274 = scalar_lea.vmem [#allocation8], %s273
        %v276 = vld [vmem:[%s237] sm:$0xf]
        %v277 = vld [vmem:[#allocation5] sm:$0xf]
        %v278 = vld [vmem:[#allocation5 + $0x4] sm:$0xf]
        %v279 = vld [vmem:[#allocation5 + $0x8] sm:$0xf]
        %v280 = vld [vmem:[#allocation5 + $0xc] sm:$0xf]
        %v281 = vld [vmem:[%s2] sm:$0x1]
        %v283 = vperm.slane %v281, 0
        %v289 = vunpack.c.l.b16 %v277
        %v290 = vunpack.c.l.b16 %v278
        %v291 = vunpack.c.l.b16 %v279
        %v292 = vunpack.c.l.b16 %v280
        %v293 = vpack.c.b16 %v290, %v289
        %v294 = vpack.c.b16 %v292, %v291
        %vm297 = vcmask 261120
        %v299 = vsel %vm297, %v276, 0
        %301 = vmatpush.bf16.msra.mxu0 0
        %302 = vmatpush.bf16.msra.mxu0 0
        %303 = vmatpush.bf16.msra.mxu0 0
        %304 = vmatpush.bf16.msra.mxu0 0
        %305 = vmatpush.bf16.msra.mxu0 0
        %306 = vmatpush.bf16.msra.mxu0 0
        %307 = vmatpush.bf16.msra.mxu0 %v294
        %308 = vmatpush.bf16.msra.mxu0 %v293
        %309 = vmatmul.bf16.gmra.mxu0 %v299
        %v310 = vpop.f32.mrf.mxu0
        %v311 = vadd.f32 %v283, %v310
        %v312 = vpop.f32.mrf.mxu0
        %313 = vdwg.mxu0
        %v314 = vmul.f32 %v311, 0.35355338
        %316 = vrot.lane.b32.xlu0 %v314, 120
        %v317 = vpop.permute.xlu0 %316
        %319 = vrot.lane.b32.xlu0 %v314, 112
        %v320 = vpop.permute.xlu0 %319
        %322 = vrot.lane.b32.xlu0 %v314, 104
        %v323 = vpop.permute.xlu0 %322
        %v325 = vrot.slane %v320, 4
        %vm326 = vcmask 1047556
        %v327 = vsel %vm326, %v325, %v314
        %v328 = vrot.slane %v314, 4
        %v329 = vsel %vm326, %v320, %v328
        %v331 = vunpack.c.l.s4 1983009808
        %v332 = vunpack.c.0.s8 %v331
        %v333 = vperm.slane %v327, %v332
        %v335 = vunpack.c.l.s4 1983009808
        %v336 = vunpack.c.0.s8 %v335
        %v337 = vperm.slane %v329, %v336
        %v338 = vrot.slane %v323, 4
        %v339 = vsel %vm326, %v338, %v317
        %v340 = vrot.slane %v317, 4
        %v341 = vsel %vm326, %v323, %v340
        %v343 = vunpack.c.l.s4 1983009808
        %v344 = vunpack.c.0.s8 %v343
        %v345 = vperm.slane %v339, %v344
        %v347 = vunpack.c.l.s4 1983009808
        %v348 = vunpack.c.0.s8 %v347
        %v349 = vperm.slane %v341, %v348
        %v350 = vrot.slane %v345, 4
        %v351 = vsel %vm326, %v350, %v333
        %v352 = vrot.slane %v333, 4
        %v353 = vsel %vm326, %v345, %v352
        %v355 = vunpack.c.l.s4 1934713408
        %v356 = vunpack.c.0.s8 %v355
        %v357 = vperm.slane %v351, %v356
        %v359 = vunpack.c.l.s4 1934713408
        %v360 = vunpack.c.0.s8 %v359
        %v361 = vperm.slane %v353, %v360
        %v362 = vrot.slane %v349, 4
        %v363 = vsel %vm326, %v362, %v337
        %v364 = vrot.slane %v337, 4
        %v365 = vsel %vm326, %v349, %v364
        %v367 = vunpack.c.l.s4 1934713408
        %v368 = vunpack.c.0.s8 %v367
        %v369 = vperm.slane %v363, %v368
        %v371 = vunpack.c.l.s4 1934713408
        %v372 = vunpack.c.0.s8 %v371
        %v373 = vperm.slane %v365, %v372
        %v374 = vrot.slane %v357, 4
        %v375 = vsel %vm326, 0.0, %v374
        %v376 = vrot.slane %v361, 4
        %v377 = vsel %vm326, 0.0, %v376
        %v378 = vrot.slane %v369, 4
        %v379 = vsel %vm326, 0.0, %v378
        %v380 = vrot.slane %v373, 4
        %v381 = vsel %vm326, 0.0, %v380
        %v382 = vpack.c.bf16 %v357, %v357
        %v383 = vpack.c.bf16 %v375, %v375
        %v384 = vpack.c.bf16 %v361, %v361
        %v385 = vpack.c.bf16 %v377, %v377
        %v386 = vpack.c.bf16 %v369, %v369
        %v387 = vpack.c.bf16 %v379, %v379
        %v388 = vpack.c.bf16 %v373, %v373
        %v389 = vpack.c.bf16 %v381, %v381
        %391 = vrot.lane.b32.xlu0 %v311, 120
        %v392 = vpop.permute.xlu0 %391
        %393 = vrot.lane.b32.xlu0 %v311, 112
        %v394 = vpop.permute.xlu0 %393
        %395 = vrot.lane.b32.xlu0 %v311, 104
        %v396 = vpop.permute.xlu0 %395
        %397 = vrot.lane.b32.xlu0 %v311, 96
        %v398 = vpop.permute.xlu0 %397
        %399 = vrot.lane.b32.xlu0 %v392, 96
        %v400 = vpop.permute.xlu0 %399
        %401 = vrot.lane.b32.xlu0 %v394, 96
        %v402 = vpop.permute.xlu0 %401
        %403 = vrot.lane.b32.xlu0 %v396, 96
        %v404 = vpop.permute.xlu0 %403
        %v409 = vrot.slane %v402, 4
        %v410 = vsel %vm326, %v409, %v398
        %v411 = vrot.slane %v398, 4
        %v412 = vsel %vm326, %v402, %v411
        %v414 = vunpack.c.l.s4 1983009808
        %v415 = vunpack.c.0.s8 %v414
        %v416 = vperm.slane %v410, %v415
        %v418 = vunpack.c.l.s4 1983009808
        %v419 = vunpack.c.0.s8 %v418
        %v420 = vperm.slane %v412, %v419
        %v421 = vrot.slane %v404, 4
        %v422 = vsel %vm326, %v421, %v400
        %v423 = vrot.slane %v400, 4
        %v424 = vsel %vm326, %v404, %v423
        %v426 = vunpack.c.l.s4 1983009808
        %v427 = vunpack.c.0.s8 %v426
        %v428 = vperm.slane %v422, %v427
        %v430 = vunpack.c.l.s4 1983009808
        %v431 = vunpack.c.0.s8 %v430
        %v432 = vperm.slane %v424, %v431
        %v433 = vrot.slane %v428, 4
        %v434 = vsel %vm326, %v433, %v416
        %v435 = vrot.slane %v416, 4
        %v436 = vsel %vm326, %v428, %v435
        %v438 = vunpack.c.l.s4 1934713408
        %v439 = vunpack.c.0.s8 %v438
        %v440 = vperm.slane %v434, %v439
        %v442 = vunpack.c.l.s4 1934713408
        %v443 = vunpack.c.0.s8 %v442
        %v444 = vperm.slane %v436, %v443
        %v445 = vrot.slane %v432, 4
        %v446 = vsel %vm326, %v445, %v420
        %v447 = vrot.slane %v420, 4
        %v448 = vsel %vm326, %v432, %v447
        %v450 = vunpack.c.l.s4 1934713408
        %v451 = vunpack.c.0.s8 %v450
        %v452 = vperm.slane %v446, %v451
        %v454 = vunpack.c.l.s4 1934713408
        %v455 = vunpack.c.0.s8 %v454
        %v456 = vperm.slane %v448, %v455
        %v457 = vrot.slane %v440, 4
        %v458 = vsel %vm326, 0.0, %v457
        %v459 = vrot.slane %v444, 4
        %v460 = vsel %vm326, 0.0, %v459
        %v461 = vrot.slane %v452, 4
        %v462 = vsel %vm326, 0.0, %v461
        %v463 = vrot.slane %v456, 4
        %v464 = vsel %vm326, 0.0, %v463
        %v465 = vpack.c.bf16 %v440, %v440
        %v466 = vpack.c.bf16 %v458, %v458
        %v467 = vpack.c.bf16 %v444, %v444
        %v468 = vpack.c.bf16 %v460, %v460
        %v469 = vpack.c.bf16 %v452, %v452
        %v470 = vpack.c.bf16 %v462, %v462
        %v471 = vpack.c.bf16 %v456, %v456
        %v472 = vpack.c.bf16 %v464, %v464
        %473 = vrot.lane.b32.xlu0 %v311, 64
        %v474 = vpop.permute.xlu0 %473
        %475 = vrot.lane.b32.xlu0 %v392, 64
        %v476 = vpop.permute.xlu0 %475
        %477 = vrot.lane.b32.xlu0 %v394, 64
        %v478 = vpop.permute.xlu0 %477
        %479 = vrot.lane.b32.xlu0 %v396, 64
        %v480 = vpop.permute.xlu0 %479
        %v485 = vrot.slane %v478, 4
        %v486 = vsel %vm326, %v485, %v474
        %v487 = vrot.slane %v474, 4
        %v488 = vsel %vm326, %v478, %v487
        %v490 = vunpack.c.l.s4 1983009808
        %v491 = vunpack.c.0.s8 %v490
        %v492 = vperm.slane %v486, %v491
        %v494 = vunpack.c.l.s4 1983009808
        %v495 = vunpack.c.0.s8 %v494
        %v496 = vperm.slane %v488, %v495
        %v497 = vrot.slane %v480, 4
        %v498 = vsel %vm326, %v497, %v476
        %v499 = vrot.slane %v476, 4
        %v500 = vsel %vm326, %v480, %v499
        %v502 = vunpack.c.l.s4 1983009808
        %v503 = vunpack.c.0.s8 %v502
        %v504 = vperm.slane %v498, %v503
        %v506 = vunpack.c.l.s4 1983009808
        %v507 = vunpack.c.0.s8 %v506
        %v508 = vperm.slane %v500, %v507
        %v509 = vrot.slane %v504, 4
        %v510 = vsel %vm326, %v509, %v492
        %v511 = vrot.slane %v492, 4
        %v512 = vsel %vm326, %v504, %v511
        %v514 = vunpack.c.l.s4 1934713408
        %v515 = vunpack.c.0.s8 %v514
        %v516 = vperm.slane %v510, %v515
        %v518 = vunpack.c.l.s4 1934713408
        %v519 = vunpack.c.0.s8 %v518
        %v520 = vperm.slane %v512, %v519
        %v521 = vrot.slane %v508, 4
        %v522 = vsel %vm326, %v521, %v496
        %v523 = vrot.slane %v496, 4
        %v524 = vsel %vm326, %v508, %v523
        %v526 = vunpack.c.l.s4 1934713408
        %v527 = vunpack.c.0.s8 %v526
        %v528 = vperm.slane %v522, %v527
        %v530 = vunpack.c.l.s4 1934713408
        %v531 = vunpack.c.0.s8 %v530
        %v532 = vperm.slane %v524, %v531
        %v533 = vrot.slane %v516, 4
        %v534 = vsel %vm326, 0.0, %v533
        %v535 = vrot.slane %v520, 4
        %v536 = vsel %vm326, 0.0, %v535
        %v537 = vrot.slane %v528, 4
        %v538 = vsel %vm326, 0.0, %v537
        %v539 = vrot.slane %v532, 4
        %v540 = vsel %vm326, 0.0, %v539
        %v541 = vpack.c.bf16 %v516, %v516
        %v542 = vpack.c.bf16 %v534, %v534
        %v543 = vpack.c.bf16 %v520, %v520
        %v544 = vpack.c.bf16 %v536, %v536
        %v545 = vpack.c.bf16 %v528, %v528
        %v546 = vpack.c.bf16 %v538, %v538
        %v547 = vpack.c.bf16 %v532, %v532
        %v548 = vpack.c.bf16 %v540, %v540
        %v549 = vrot.slane %v386, 4
        %vm550 = vcmask 1047556
        %v551 = vsel %vm550, %v549, %v382
        %v553 = vunpack.c.l.s4 1983009808
        %v554 = vunpack.c.0.s8 %v553
        %v555 = vperm.slane %v551, %v554
        %v556 = vrot.slane %v388, 4
        %v557 = vsel %vm550, %v556, %v384
        %v559 = vunpack.c.l.s4 1983009808
        %v560 = vunpack.c.0.s8 %v559
        %v561 = vperm.slane %v557, %v560
        %v562 = vrot.slane %v561, 4
        %v563 = vsel %vm550, %v562, %v555
        %v565 = vunpack.c.l.s4 1934713408
        %v566 = vunpack.c.0.s8 %v565
        %v567 = vperm.slane %v563, %v566
        %v568 = vrot.slane %v567, 4
        %v569 = vsel %vm550, 0, %v568
        %v570 = vrot.slane %v387, 4
        %v571 = vsel %vm550, %v570, %v383
        %v573 = vunpack.c.l.s4 1983009808
        %v574 = vunpack.c.0.s8 %v573
        %v575 = vperm.slane %v571, %v574
        %v576 = vrot.slane %v389, 4
        %v577 = vsel %vm550, %v576, %v385
        %v579 = vunpack.c.l.s4 1983009808
        %v580 = vunpack.c.0.s8 %v579
        %v581 = vperm.slane %v577, %v580
        %v582 = vrot.slane %v581, 4
        %v583 = vsel %vm550, %v582, %v575
        %v585 = vunpack.c.l.s4 1934713408
        %v586 = vunpack.c.0.s8 %v585
        %v587 = vperm.slane %v583, %v586
        %v588 = vrot.slane %v587, 4
        %v589 = vsel %vm550, 0, %v588
        %v592 = vpack.i.b16 %v587, %v567
        %v593 = vshrl.u32 %v567, 16
        %v594 = vshrl.u32 %v587, 16
        %v595 = vpack.i.b16 %v594, %v593
        %v598 = vpack.i.b16 %v589, %v569
        %v599 = vshrl.u32 %v569, 16
        %v600 = vshrl.u32 %v589, 16
        %v601 = vpack.i.b16 %v600, %v599
        %602 = vxpose.xlu0.c.b16.start [1/8] %v465, 128
        %603 = vxpose.xlu0.c.b16.cont [2/8] 0, 128
        %604 = vxpose.xlu0.c.b16.cont [3/8] 0, 128
        %605 = vxpose.xlu0.c.b16.cont [4/8] 0, 128
        %606 = vxpose.xlu0.c.b16.cont [5/8] 0, 128
        %607 = vxpose.xlu0.c.b16.cont [6/8] 0, 128
        %608 = vxpose.xlu0.c.b16.cont [7/8] 0, 128
        %609 = vxpose.xlu0.c.b16.end [8/8] 0, 128
        %v610 = vpop.trf.xlu0
        %v611 = vpop.trf.xlu0
        %v612 = vpop.trf.xlu0
        %v613 = vpop.trf.xlu0
        %v614 = vpop.trf.xlu0
        %v615 = vpop.trf.xlu0
        %v616 = vpop.trf.xlu0
        %v617 = vpop.trf.xlu0
        %618 = vxpose.xlu0.c.b16.start [1/8] %v466, 128
        %619 = vxpose.xlu0.c.b16.cont [2/8] 0, 128
        %620 = vxpose.xlu0.c.b16.cont [3/8] 0, 128
        %621 = vxpose.xlu0.c.b16.cont [4/8] 0, 128
        %622 = vxpose.xlu0.c.b16.cont [5/8] 0, 128
        %623 = vxpose.xlu0.c.b16.cont [6/8] 0, 128
        %624 = vxpose.xlu0.c.b16.cont [7/8] 0, 128
        %625 = vxpose.xlu0.c.b16.end [8/8] 0, 128
        %v626 = vpop.trf.xlu0
        %v627 = vpop.trf.xlu0
        %v628 = vpop.trf.xlu0
        %v629 = vpop.trf.xlu0
        %v630 = vpop.trf.xlu0
        %v631 = vpop.trf.xlu0
        %v632 = vpop.trf.xlu0
        %v633 = vpop.trf.xlu0
        %634 = vxpose.xlu0.c.b16.start [1/8] %v467, 128
        %635 = vxpose.xlu0.c.b16.cont [2/8] 0, 128
        %636 = vxpose.xlu0.c.b16.cont [3/8] 0, 128
        %637 = vxpose.xlu0.c.b16.cont [4/8] 0, 128
        %638 = vxpose.xlu0.c.b16.cont [5/8] 0, 128
        %639 = vxpose.xlu0.c.b16.cont [6/8] 0, 128
        %640 = vxpose.xlu0.c.b16.cont [7/8] 0, 128
        %641 = vxpose.xlu0.c.b16.end [8/8] 0, 128
        %v642 = vpop.trf.xlu0
        %v643 = vpop.trf.xlu0
        %v644 = vpop.trf.xlu0
        %v645 = vpop.trf.xlu0
        %v646 = vpop.trf.xlu0
        %v647 = vpop.trf.xlu0
        %v648 = vpop.trf.xlu0
        %v649 = vpop.trf.xlu0
        %650 = vxpose.xlu0.c.b16.start [1/8] %v468, 128
        %651 = vxpose.xlu0.c.b16.cont [2/8] 0, 128
        %652 = vxpose.xlu0.c.b16.cont [3/8] 0, 128
        %653 = vxpose.xlu0.c.b16.cont [4/8] 0, 128
        %654 = vxpose.xlu0.c.b16.cont [5/8] 0, 128
        %655 = vxpose.xlu0.c.b16.cont [6/8] 0, 128
        %656 = vxpose.xlu0.c.b16.cont [7/8] 0, 128
        %657 = vxpose.xlu0.c.b16.end [8/8] 0, 128
        %v658 = vpop.trf.xlu0
        %v659 = vpop.trf.xlu0
        %v660 = vpop.trf.xlu0
        %v661 = vpop.trf.xlu0
        %v662 = vpop.trf.xlu0
        %v663 = vpop.trf.xlu0
        %v664 = vpop.trf.xlu0
        %v665 = vpop.trf.xlu0
        %666 = vxpose.xlu0.c.b16.start [1/8] %v469, 128
        %667 = vxpose.xlu0.c.b16.cont [2/8] 0, 128
        %668 = vxpose.xlu0.c.b16.cont [3/8] 0, 128
        %669 = vxpose.xlu0.c.b16.cont [4/8] 0, 128
        %670 = vxpose.xlu0.c.b16.cont [5/8] 0, 128
        %671 = vxpose.xlu0.c.b16.cont [6/8] 0, 128
        %672 = vxpose.xlu0.c.b16.cont [7/8] 0, 128
        %673 = vxpose.xlu0.c.b16.end [8/8] 0, 128
        %v674 = vpop.trf.xlu0
        %v675 = vpop.trf.xlu0
        %v676 = vpop.trf.xlu0
        %v677 = vpop.trf.xlu0
        %v678 = vpop.trf.xlu0
        %v679 = vpop.trf.xlu0
        %v680 = vpop.trf.xlu0
        %v681 = vpop.trf.xlu0
        %682 = vxpose.xlu0.c.b16.start [1/8] %v470, 128
        %683 = vxpose.xlu0.c.b16.cont [2/8] 0, 128
        %684 = vxpose.xlu0.c.b16.cont [3/8] 0, 128
        %685 = vxpose.xlu0.c.b16.cont [4/8] 0, 128
        %686 = vxpose.xlu0.c.b16.cont [5/8] 0, 128
        %687 = vxpose.xlu0.c.b16.cont [6/8] 0, 128
        %688 = vxpose.xlu0.c.b16.cont [7/8] 0, 128
        %689 = vxpose.xlu0.c.b16.end [8/8] 0, 128
        %v690 = vpop.trf.xlu0
        %v691 = vpop.trf.xlu0
        %v692 = vpop.trf.xlu0
        %v693 = vpop.trf.xlu0
        %v694 = vpop.trf.xlu0
        %v695 = vpop.trf.xlu0
        %v696 = vpop.trf.xlu0
        %v697 = vpop.trf.xlu0
        %698 = vxpose.xlu0.c.b16.start [1/8] %v471, 128
        %699 = vxpose.xlu0.c.b16.cont [2/8] 0, 128
        %700 = vxpose.xlu0.c.b16.cont [3/8] 0, 128
        %701 = vxpose.xlu0.c.b16.cont [4/8] 0, 128
        %702 = vxpose.xlu0.c.b16.cont [5/8] 0, 128
        %703 = vxpose.xlu0.c.b16.cont [6/8] 0, 128
        %704 = vxpose.xlu0.c.b16.cont [7/8] 0, 128
        %705 = vxpose.xlu0.c.b16.end [8/8] 0, 128
        %v706 = vpop.trf.xlu0
        %v707 = vpop.trf.xlu0
        %v708 = vpop.trf.xlu0
        %v709 = vpop.trf.xlu0
        %v710 = vpop.trf.xlu0
        %v711 = vpop.trf.xlu0
        %v712 = vpop.trf.xlu0
        %v713 = vpop.trf.xlu0
        %714 = vxpose.xlu0.c.b16.start [1/8] %v472, 128
        %715 = vxpose.xlu0.c.b16.cont [2/8] 0, 128
        %716 = vxpose.xlu0.c.b16.cont [3/8] 0, 128
        %717 = vxpose.xlu0.c.b16.cont [4/8] 0, 128
        %718 = vxpose.xlu0.c.b16.cont [5/8] 0, 128
        %719 = vxpose.xlu0.c.b16.cont [6/8] 0, 128
        %720 = vxpose.xlu0.c.b16.cont [7/8] 0, 128
        %721 = vxpose.xlu0.c.b16.end [8/8] 0, 128
        %v722 = vpop.trf.xlu0
        %v723 = vpop.trf.xlu0
        %v724 = vpop.trf.xlu0
        %v725 = vpop.trf.xlu0
        %v726 = vpop.trf.xlu0
        %v727 = vpop.trf.xlu0
        %v728 = vpop.trf.xlu0
        %v729 = vpop.trf.xlu0
        %v730 = vrot.slane %v674, 4
        %v731 = vsel %vm550, %v730, %v610
        %v733 = vunpack.c.l.s4 1983009808
        %v734 = vunpack.c.0.s8 %v733
        %v735 = vperm.slane %v731, %v734
        %v736 = vrot.slane %v706, 4
        %v737 = vsel %vm550, %v736, %v642
        %v739 = vunpack.c.l.s4 1983009808
        %v740 = vunpack.c.0.s8 %v739
        %v741 = vperm.slane %v737, %v740
        %v742 = vrot.slane %v741, 4
        %v743 = vsel %vm550, %v742, %v735
        %v744 = vrot.slane %v735, 4
        %v745 = vsel %vm550, %v741, %v744
        %v747 = vunpack.c.l.s4 1934713408
        %v748 = vunpack.c.0.s8 %v747
        %v749 = vperm.slane %v743, %v748
        %v751 = vunpack.c.l.s4 1934713408
        %v752 = vunpack.c.0.s8 %v751
        %v753 = vperm.slane %v745, %v752
        %v754 = vrot.slane %v749, 4
        %v755 = vsel %vm550, 0, %v754
        %v756 = vrot.slane %v753, 4
        %v757 = vsel %vm550, 0, %v756
        %v758 = vrot.slane %v690, 4
        %v759 = vsel %vm550, %v758, %v626
        %v761 = vunpack.c.l.s4 1983009808
        %v762 = vunpack.c.0.s8 %v761
        %v763 = vperm.slane %v759, %v762
        %v764 = vrot.slane %v722, 4
        %v765 = vsel %vm550, %v764, %v658
        %v767 = vunpack.c.l.s4 1983009808
        %v768 = vunpack.c.0.s8 %v767
        %v769 = vperm.slane %v765, %v768
        %v770 = vrot.slane %v769, 4
        %v771 = vsel %vm550, %v770, %v763
        %v772 = vrot.slane %v763, 4
        %v773 = vsel %vm550, %v769, %v772
        %v775 = vunpack.c.l.s4 1934713408
        %v776 = vunpack.c.0.s8 %v775
        %v777 = vperm.slane %v771, %v776
        %v779 = vunpack.c.l.s4 1934713408
        %v780 = vunpack.c.0.s8 %v779
        %v781 = vperm.slane %v773, %v780
        %v782 = vrot.slane %v777, 4
        %v783 = vsel %vm550, 0, %v782
        %v784 = vrot.slane %v781, 4
        %v785 = vsel %vm550, 0, %v784
        %v788 = vpack.i.b16 %v777, %v749
        %v790 = vshrl.u32 %v749, 16
        %v791 = vshrl.u32 %v777, 16
        %v792 = vpack.i.b16 %v791, %v790
        %v796 = vpack.i.b16 %v783, %v755
        %v798 = vshrl.u32 %v755, 16
        %v799 = vshrl.u32 %v783, 16
        %v800 = vpack.i.b16 %v799, %v798
        %v804 = vpack.i.b16 %v781, %v753
        %v806 = vshrl.u32 %v753, 16
        %v807 = vshrl.u32 %v781, 16
        %v808 = vpack.i.b16 %v807, %v806
        %v812 = vpack.i.b16 %v785, %v757
        %v814 = vshrl.u32 %v757, 16
        %v815 = vshrl.u32 %v785, 16
        %v816 = vpack.i.b16 %v815, %v814
        %818 = vxpose.xlu0.c.b16.start [1/8] %v788, 128
        %819 = vxpose.xlu0.c.b16.cont [2/8] 0, 128
        %820 = vxpose.xlu0.c.b16.cont [3/8] 0, 128
        %821 = vxpose.xlu0.c.b16.cont [4/8] 0, 128
        %822 = vxpose.xlu0.c.b16.cont [5/8] 0, 128
        %823 = vxpose.xlu0.c.b16.cont [6/8] 0, 128
        %824 = vxpose.xlu0.c.b16.cont [7/8] 0, 128
        %825 = vxpose.xlu0.c.b16.end [8/8] 0, 128
        %v826 = vpop.trf.xlu0
        %v827 = vpop.trf.xlu0
        %v828 = vpop.trf.xlu0
        %v829 = vpop.trf.xlu0
        %v830 = vpop.trf.xlu0
        %v831 = vpop.trf.xlu0
        %v832 = vpop.trf.xlu0
        %v833 = vpop.trf.xlu0
        %834 = vxpose.xlu0.c.b16.start [1/8] %v792, 128
        %835 = vxpose.xlu0.c.b16.cont [2/8] 0, 128
        %836 = vxpose.xlu0.c.b16.cont [3/8] 0, 128
        %837 = vxpose.xlu0.c.b16.cont [4/8] 0, 128
        %838 = vxpose.xlu0.c.b16.cont [5/8] 0, 128
        %839 = vxpose.xlu0.c.b16.cont [6/8] 0, 128
        %840 = vxpose.xlu0.c.b16.cont [7/8] 0, 128
        %841 = vxpose.xlu0.c.b16.end [8/8] 0, 128
        %v842 = vpop.trf.xlu0
        %v843 = vpop.trf.xlu0
        %v844 = vpop.trf.xlu0
        %v845 = vpop.trf.xlu0
        %v846 = vpop.trf.xlu0
        %v847 = vpop.trf.xlu0
        %v848 = vpop.trf.xlu0
        %v849 = vpop.trf.xlu0
        %850 = vxpose.xlu0.c.b16.start [1/8] %v796, 128
        %851 = vxpose.xlu0.c.b16.cont [2/8] 0, 128
        %852 = vxpose.xlu0.c.b16.cont [3/8] 0, 128
        %853 = vxpose.xlu0.c.b16.cont [4/8] 0, 128
        %854 = vxpose.xlu0.c.b16.cont [5/8] 0, 128
        %855 = vxpose.xlu0.c.b16.cont [6/8] 0, 128
        %856 = vxpose.xlu0.c.b16.cont [7/8] 0, 128
        %857 = vxpose.xlu0.c.b16.end [8/8] 0, 128
        %v858 = vpop.trf.xlu0
        %v859 = vpop.trf.xlu0
        %v860 = vpop.trf.xlu0
        %v861 = vpop.trf.xlu0
        %v862 = vpop.trf.xlu0
        %v863 = vpop.trf.xlu0
        %v864 = vpop.trf.xlu0
        %v865 = vpop.trf.xlu0
        %866 = vxpose.xlu0.c.b16.start [1/8] %v800, 128
        %867 = vxpose.xlu0.c.b16.cont [2/8] 0, 128
        %868 = vxpose.xlu0.c.b16.cont [3/8] 0, 128
        %869 = vxpose.xlu0.c.b16.cont [4/8] 0, 128
        %870 = vxpose.xlu0.c.b16.cont [5/8] 0, 128
        %871 = vxpose.xlu0.c.b16.cont [6/8] 0, 128
        %872 = vxpose.xlu0.c.b16.cont [7/8] 0, 128
        %873 = vxpose.xlu0.c.b16.end [8/8] 0, 128
        %v874 = vpop.trf.xlu0
        %v875 = vpop.trf.xlu0
        %v876 = vpop.trf.xlu0
        %v877 = vpop.trf.xlu0
        %v878 = vpop.trf.xlu0
        %v879 = vpop.trf.xlu0
        %v880 = vpop.trf.xlu0
        %v881 = vpop.trf.xlu0
        %882 = vxpose.xlu0.c.b16.start [1/8] %v804, 128
        %883 = vxpose.xlu0.c.b16.cont [2/8] 0, 128
        %884 = vxpose.xlu0.c.b16.cont [3/8] 0, 128
        %885 = vxpose.xlu0.c.b16.cont [4/8] 0, 128
        %886 = vxpose.xlu0.c.b16.cont [5/8] 0, 128
        %887 = vxpose.xlu0.c.b16.cont [6/8] 0, 128
        %888 = vxpose.xlu0.c.b16.cont [7/8] 0, 128
        %889 = vxpose.xlu0.c.b16.end [8/8] 0, 128
        %v890 = vpop.trf.xlu0
        %v891 = vpop.trf.xlu0
        %v892 = vpop.trf.xlu0
        %v893 = vpop.trf.xlu0
        %v894 = vpop.trf.xlu0
        %v895 = vpop.trf.xlu0
        %v896 = vpop.trf.xlu0
        %v897 = vpop.trf.xlu0
        %898 = vxpose.xlu0.c.b16.start [1/8] %v808, 128
        %899 = vxpose.xlu0.c.b16.cont [2/8] 0, 128
        %900 = vxpose.xlu0.c.b16.cont [3/8] 0, 128
        %901 = vxpose.xlu0.c.b16.cont [4/8] 0, 128
        %902 = vxpose.xlu0.c.b16.cont [5/8] 0, 128
        %903 = vxpose.xlu0.c.b16.cont [6/8] 0, 128
        %904 = vxpose.xlu0.c.b16.cont [7/8] 0, 128
        %905 = vxpose.xlu0.c.b16.end [8/8] 0, 128
        %v906 = vpop.trf.xlu0
        %v907 = vpop.trf.xlu0
        %v908 = vpop.trf.xlu0
        %v909 = vpop.trf.xlu0
        %v910 = vpop.trf.xlu0
        %v911 = vpop.trf.xlu0
        %v912 = vpop.trf.xlu0
        %v913 = vpop.trf.xlu0
        %914 = vxpose.xlu0.c.b16.start [1/8] %v812, 128
        %915 = vxpose.xlu0.c.b16.cont [2/8] 0, 128
        %916 = vxpose.xlu0.c.b16.cont [3/8] 0, 128
        %917 = vxpose.xlu0.c.b16.cont [4/8] 0, 128
        %918 = vxpose.xlu0.c.b16.cont [5/8] 0, 128
        %919 = vxpose.xlu0.c.b16.cont [6/8] 0, 128
        %920 = vxpose.xlu0.c.b16.cont [7/8] 0, 128
        %921 = vxpose.xlu0.c.b16.end [8/8] 0, 128
        %v922 = vpop.trf.xlu0
        %v923 = vpop.trf.xlu0
        %v924 = vpop.trf.xlu0
        %v925 = vpop.trf.xlu0
        %v926 = vpop.trf.xlu0
        %v927 = vpop.trf.xlu0
        %v928 = vpop.trf.xlu0
        %v929 = vpop.trf.xlu0
        %930 = vxpose.xlu0.c.b16.start [1/8] %v816, 128
        %931 = vxpose.xlu0.c.b16.cont [2/8] 0, 128
        %932 = vxpose.xlu0.c.b16.cont [3/8] 0, 128
        %933 = vxpose.xlu0.c.b16.cont [4/8] 0, 128
        %934 = vxpose.xlu0.c.b16.cont [5/8] 0, 128
        %935 = vxpose.xlu0.c.b16.cont [6/8] 0, 128
        %936 = vxpose.xlu0.c.b16.cont [7/8] 0, 128
        %937 = vxpose.xlu0.c.b16.end [8/8] 0, 128
        %v938 = vpop.trf.xlu0
        %v939 = vpop.trf.xlu0
        %v940 = vpop.trf.xlu0
        %v941 = vpop.trf.xlu0
        %v942 = vpop.trf.xlu0
        %v943 = vpop.trf.xlu0
        %v944 = vpop.trf.xlu0
        %v945 = vpop.trf.xlu0
        %v946 = vrot.slane %v890, 4
        %v947 = vsel %vm550, %v946, %v826
        %v949 = vunpack.c.l.s4 1983009808
        %v950 = vunpack.c.0.s8 %v949
        %v951 = vperm.slane %v947, %v950
        %v952 = vrot.slane %v922, 4
        %v953 = vsel %vm550, %v952, %v858
        %v955 = vunpack.c.l.s4 1983009808
        %v956 = vunpack.c.0.s8 %v955
        %v957 = vperm.slane %v953, %v956
        %v958 = vrot.slane %v957, 4
        %v959 = vsel %vm550, %v958, %v951
        %v961 = vunpack.c.l.s4 1934713408
        %v962 = vunpack.c.0.s8 %v961
        %v963 = vperm.slane %v959, %v962
        %v964 = vrot.slane %v963, 4
        %v965 = vsel %vm550, 0, %v964
        %v966 = vrot.slane %v906, 4
        %v967 = vsel %vm550, %v966, %v842
        %v969 = vunpack.c.l.s4 1983009808
        %v970 = vunpack.c.0.s8 %v969
        %v971 = vperm.slane %v967, %v970
        %v972 = vrot.slane %v938, 4
        %v973 = vsel %vm550, %v972, %v874
        %v975 = vunpack.c.l.s4 1983009808
        %v976 = vunpack.c.0.s8 %v975
        %v977 = vperm.slane %v973, %v976
        %v978 = vrot.slane %v977, 4
        %v979 = vsel %vm550, %v978, %v971
        %v981 = vunpack.c.l.s4 1934713408
        %v982 = vunpack.c.0.s8 %v981
        %v983 = vperm.slane %v979, %v982
        %v984 = vrot.slane %v983, 4
        %v985 = vsel %vm550, 0, %v984
        %v988 = vpack.i.b16 %v983, %v963
        %v989 = vshrl.u32 %v963, 16
        %v990 = vshrl.u32 %v983, 16
        %v991 = vpack.i.b16 %v990, %v989
        %v994 = vpack.i.b16 %v985, %v965
        %v995 = vshrl.u32 %v965, 16
        %v996 = vshrl.u32 %v985, 16
        %v997 = vpack.i.b16 %v996, %v995
        %vm998 = vcmask 64512
        %v1000 = vsel %vm998, %v592, 0
        %vm1002 = vcmask 1043456
        %v1004 = vsel %vm1002, %v988, 0
        %1006 = vmatpush.bf16.msra.mxu0 0
        %1007 = vmatpush.bf16.msra.mxu0 0
        %1008 = vmatpush.bf16.msra.mxu0 0
        %1009 = vmatpush.bf16.msra.mxu0 0
        %1010 = vmatpush.bf16.msra.mxu0 0
        %1011 = vmatpush.bf16.msra.mxu0 0
        %1012 = vmatpush.bf16.msra.mxu0 0
        %1013 = vmatpush.bf16.msra.mxu0 %v1004
        %1014 = vmatmul.bf16.gmra.mxu0 %v1000
        %v1015 = vpop.f32.mrf.mxu0
        %v1016 = vadd.f32 0.0, %v1015
        %v1017 = vpop.f32.mrf.mxu0
        %1018 = vdwg.mxu0
        %v1020 = vsel %vm998, %v595, 0
        %v1023 = vsel %vm1002, %v991, 0
        %1025 = vmatpush.bf16.msra.mxu0 0
        %1026 = vmatpush.bf16.msra.mxu0 0
        %1027 = vmatpush.bf16.msra.mxu0 0
        %1028 = vmatpush.bf16.msra.mxu0 0
        %1029 = vmatpush.bf16.msra.mxu0 0
        %1030 = vmatpush.bf16.msra.mxu0 0
        %1031 = vmatpush.bf16.msra.mxu0 0
        %1032 = vmatpush.bf16.msra.mxu0 %v1023
        %1033 = vmatmul.bf16.gmra.mxu0 %v1020
        %v1034 = vpop.f32.mrf.mxu0
        %v1035 = vadd.f32 0.0, %v1034
        %v1036 = vpop.f32.mrf.mxu0
        %1037 = vdwg.mxu0
        %v1039 = vsel %vm998, %v598, 0
        %v1042 = vsel %vm1002, %v994, 0
        %1044 = vmatpush.bf16.msra.mxu0 0
        %1045 = vmatpush.bf16.msra.mxu0 0
        %1046 = vmatpush.bf16.msra.mxu0 0
        %1047 = vmatpush.bf16.msra.mxu0 0
        %1048 = vmatpush.bf16.msra.mxu0 0
        %1049 = vmatpush.bf16.msra.mxu0 0
        %1050 = vmatpush.bf16.msra.mxu0 0
        %1051 = vmatpush.bf16.msra.mxu0 %v1042
        %1052 = vmatmul.bf16.gmra.mxu0 %v1039
        %v1053 = vpop.f32.mrf.mxu0
        %v1054 = vadd.f32 0.0, %v1053
        %v1055 = vpop.f32.mrf.mxu0
        %1056 = vdwg.mxu0
        %v1058 = vsel %vm998, %v601, 0
        %v1061 = vsel %vm1002, %v997, 0
        %1063 = vmatpush.bf16.msra.mxu0 0
        %1064 = vmatpush.bf16.msra.mxu0 0
        %1065 = vmatpush.bf16.msra.mxu0 0
        %1066 = vmatpush.bf16.msra.mxu0 0
        %1067 = vmatpush.bf16.msra.mxu0 0
        %1068 = vmatpush.bf16.msra.mxu0 0
        %1069 = vmatpush.bf16.msra.mxu0 0
        %1070 = vmatpush.bf16.msra.mxu0 %v1061
        %1071 = vmatmul.bf16.gmra.mxu0 %v1058
        %v1072 = vpop.f32.mrf.mxu0
        %v1073 = vadd.f32 0.0, %v1072
        %v1074 = vpop.f32.mrf.mxu0
        %1075 = vdwg.mxu0
        %v1076 = vlaneseq
        %v1077 = vshrl.u32 %v1076, 7
        %v1078 = vlaneseq
        %v1079 = vand.u32 %v1078, 127
        %vm1080 = vcmp.ge.s32.totalorder %v1077, %v1079
        %v1081 = vsel %vm1080, 1, 0
        %vm1082 = vcmp.eq.s32.totalorder %v1081, 1
        %v1083 = vsel %vm1082, %v1016, -1e+30
        %v1084 = vsel %vm1082, %v1035, -1e+30
        %v1085 = vsel %vm1082, %v1054, -1e+30
        %v1086 = vsel %vm1082, %v1073, -1e+30
        %v1087 = vsel %vm998, %v1083, -inf
        %1088 = vmax.xlane.f32.xlu0 %v1087
        %v1089 = vpop.xlane.xlu0 %1088
        %v1090 = vsel %vm998, %v1084, -inf
        %1091 = vmax.xlane.f32.xlu0 %v1090
        %v1092 = vpop.xlane.xlu0 %1091
        %v1093 = vsel %vm998, %v1085, -inf
        %1094 = vmax.xlane.f32.xlu0 %v1093
        %v1095 = vpop.xlane.xlu0 %1094
        %v1096 = vsel %vm998, %v1086, -inf
        %1097 = vmax.xlane.f32.xlu0 %v1096
        %v1098 = vpop.xlane.xlu0 %1097
        %v1099 = vsub.f32 %v1083, %v1089
        %v1100 = vsub.f32 %v1084, %v1092
        %v1101 = vsub.f32 %v1085, %v1095
        %v1102 = vsub.f32 %v1086, %v1098
        %v1103 = vmul.f32 %v1099, 1.442695
        %v1104 = vpow.pop %v1103
        %v1105 = vmul.f32 %v1100, 1.442695
        %v1106 = vpow.pop %v1105
        %v1107 = vmul.f32 %v1101, 1.442695
        %v1108 = vpow.pop %v1107
        %v1109 = vmul.f32 %v1102, 1.442695
        %v1110 = vpow.pop %v1109
        %v1111 = vsel %vm998, %v1104, 0.0
        %1112 = vadd.xlane.f32.xlu0 %v1111
        %v1113 = vpop.xlane.xlu0 %1112
        %v1114 = vsel %vm998, %v1106, 0.0
        %1115 = vadd.xlane.f32.xlu0 %v1114
        %v1116 = vpop.xlane.xlu0 %1115
        %v1117 = vsel %vm998, %v1108, 0.0
        %1118 = vadd.xlane.f32.xlu0 %v1117
        %v1119 = vpop.xlane.xlu0 %1118
        %v1120 = vsel %vm998, %v1110, 0.0
        %1121 = vadd.xlane.f32.xlu0 %v1120
        %v1122 = vpop.xlane.xlu0 %1121
        %v1123 = vrcp.pop %v1113
        %v1124 = vrcp.pop %v1116
        %v1125 = vrcp.pop %v1119
        %v1126 = vrcp.pop %v1122
        %v1127 = vmul.f32 %v1104, %v1123
        %v1128 = vmul.f32 %v1106, %v1124
        %v1129 = vmul.f32 %v1108, %v1125
        %v1130 = vmul.f32 %v1110, %v1126
        %v1131 = vpack.c.bf16 %v1127, %v1127
        %v1132 = vpack.c.bf16 %v1128, %v1128
        %v1133 = vpack.c.bf16 %v1129, %v1129
        %v1134 = vpack.c.bf16 %v1130, %v1130
        %1135 = vxpose.xlu0.c.b16.start [1/8] %v541, 128
        %1136 = vxpose.xlu0.c.b16.cont [2/8] 0, 128
        %1137 = vxpose.xlu0.c.b16.cont [3/8] 0, 128
        %1138 = vxpose.xlu0.c.b16.cont [4/8] 0, 128
        %1139 = vxpose.xlu0.c.b16.cont [5/8] 0, 128
        %1140 = vxpose.xlu0.c.b16.cont [6/8] 0, 128
        %1141 = vxpose.xlu0.c.b16.cont [7/8] 0, 128
        %1142 = vxpose.xlu0.c.b16.end [8/8] 0, 128
        %v1143 = vpop.trf.xlu0
        %v1144 = vpop.trf.xlu0
        %v1145 = vpop.trf.xlu0
        %v1146 = vpop.trf.xlu0
        %v1147 = vpop.trf.xlu0
        %v1148 = vpop.trf.xlu0
        %v1149 = vpop.trf.xlu0
        %v1150 = vpop.trf.xlu0
        %1151 = vxpose.xlu0.c.b16.start [1/8] %v542, 128
        %1152 = vxpose.xlu0.c.b16.cont [2/8] 0, 128
        %1153 = vxpose.xlu0.c.b16.cont [3/8] 0, 128
        %1154 = vxpose.xlu0.c.b16.cont [4/8] 0, 128
        %1155 = vxpose.xlu0.c.b16.cont [5/8] 0, 128
        %1156 = vxpose.xlu0.c.b16.cont [6/8] 0, 128
        %1157 = vxpose.xlu0.c.b16.cont [7/8] 0, 128
        %1158 = vxpose.xlu0.c.b16.end [8/8] 0, 128
        %v1159 = vpop.trf.xlu0
        %v1160 = vpop.trf.xlu0
        %v1161 = vpop.trf.xlu0
        %v1162 = vpop.trf.xlu0
        %v1163 = vpop.trf.xlu0
        %v1164 = vpop.trf.xlu0
        %v1165 = vpop.trf.xlu0
        %v1166 = vpop.trf.xlu0
        %1167 = vxpose.xlu0.c.b16.start [1/8] %v543, 128
        %1168 = vxpose.xlu0.c.b16.cont [2/8] 0, 128
        %1169 = vxpose.xlu0.c.b16.cont [3/8] 0, 128
        %1170 = vxpose.xlu0.c.b16.cont [4/8] 0, 128
        %1171 = vxpose.xlu0.c.b16.cont [5/8] 0, 128
        %1172 = vxpose.xlu0.c.b16.cont [6/8] 0, 128
        %1173 = vxpose.xlu0.c.b16.cont [7/8] 0, 128
        %1174 = vxpose.xlu0.c.b16.end [8/8] 0, 128
        %v1175 = vpop.trf.xlu0
        %v1176 = vpop.trf.xlu0
        %v1177 = vpop.trf.xlu0
        %v1178 = vpop.trf.xlu0
        %v1179 = vpop.trf.xlu0
        %v1180 = vpop.trf.xlu0
        %v1181 = vpop.trf.xlu0
        %v1182 = vpop.trf.xlu0
        %1183 = vxpose.xlu0.c.b16.start [1/8] %v544, 128
        %1184 = vxpose.xlu0.c.b16.cont [2/8] 0, 128
        %1185 = vxpose.xlu0.c.b16.cont [3/8] 0, 128
        %1186 = vxpose.xlu0.c.b16.cont [4/8] 0, 128
        %1187 = vxpose.xlu0.c.b16.cont [5/8] 0, 128
        %1188 = vxpose.xlu0.c.b16.cont [6/8] 0, 128
        %1189 = vxpose.xlu0.c.b16.cont [7/8] 0, 128
        %1190 = vxpose.xlu0.c.b16.end [8/8] 0, 128
        %v1191 = vpop.trf.xlu0
        %v1192 = vpop.trf.xlu0
        %v1193 = vpop.trf.xlu0
        %v1194 = vpop.trf.xlu0
        %v1195 = vpop.trf.xlu0
        %v1196 = vpop.trf.xlu0
        %v1197 = vpop.trf.xlu0
        %v1198 = vpop.trf.xlu0
        %1199 = vxpose.xlu0.c.b16.start [1/8] %v545, 128
        %1200 = vxpose.xlu0.c.b16.cont [2/8] 0, 128
        %1201 = vxpose.xlu0.c.b16.cont [3/8] 0, 128
        %1202 = vxpose.xlu0.c.b16.cont [4/8] 0, 128
        %1203 = vxpose.xlu0.c.b16.cont [5/8] 0, 128
        %1204 = vxpose.xlu0.c.b16.cont [6/8] 0, 128
        %1205 = vxpose.xlu0.c.b16.cont [7/8] 0, 128
        %1206 = vxpose.xlu0.c.b16.end [8/8] 0, 128
        %v1207 = vpop.trf.xlu0
        %v1208 = vpop.trf.xlu0
        %v1209 = vpop.trf.xlu0
        %v1210 = vpop.trf.xlu0
        %v1211 = vpop.trf.xlu0
        %v1212 = vpop.trf.xlu0
        %v1213 = vpop.trf.xlu0
        %v1214 = vpop.trf.xlu0
        %1215 = vxpose.xlu0.c.b16.start [1/8] %v546, 128
        %1216 = vxpose.xlu0.c.b16.cont [2/8] 0, 128
        %1217 = vxpose.xlu0.c.b16.cont [3/8] 0, 128
        %1218 = vxpose.xlu0.c.b16.cont [4/8] 0, 128
        %1219 = vxpose.xlu0.c.b16.cont [5/8] 0, 128
        %1220 = vxpose.xlu0.c.b16.cont [6/8] 0, 128
        %1221 = vxpose.xlu0.c.b16.cont [7/8] 0, 128
        %1222 = vxpose.xlu0.c.b16.end [8/8] 0, 128
        %v1223 = vpop.trf.xlu0
        %v1224 = vpop.trf.xlu0
        %v1225 = vpop.trf.xlu0
        %v1226 = vpop.trf.xlu0
        %v1227 = vpop.trf.xlu0
        %v1228 = vpop.trf.xlu0
        %v1229 = vpop.trf.xlu0
        %v1230 = vpop.trf.xlu0
        %1231 = vxpose.xlu0.c.b16.start [1/8] %v547, 128
        %1232 = vxpose.xlu0.c.b16.cont [2/8] 0, 128
        %1233 = vxpose.xlu0.c.b16.cont [3/8] 0, 128
        %1234 = vxpose.xlu0.c.b16.cont [4/8] 0, 128
        %1235 = vxpose.xlu0.c.b16.cont [5/8] 0, 128
        %1236 = vxpose.xlu0.c.b16.cont [6/8] 0, 128
        %1237 = vxpose.xlu0.c.b16.cont [7/8] 0, 128
        %1238 = vxpose.xlu0.c.b16.end [8/8] 0, 128
        %v1239 = vpop.trf.xlu0
        %v1240 = vpop.trf.xlu0
        %v1241 = vpop.trf.xlu0
        %v1242 = vpop.trf.xlu0
        %v1243 = vpop.trf.xlu0
        %v1244 = vpop.trf.xlu0
        %v1245 = vpop.trf.xlu0
        %v1246 = vpop.trf.xlu0
        %1247 = vxpose.xlu0.c.b16.start [1/8] %v548, 128
        %1248 = vxpose.xlu0.c.b16.cont [2/8] 0, 128
        %1249 = vxpose.xlu0.c.b16.cont [3/8] 0, 128
        %1250 = vxpose.xlu0.c.b16.cont [4/8] 0, 128
        %1251 = vxpose.xlu0.c.b16.cont [5/8] 0, 128
        %1252 = vxpose.xlu0.c.b16.cont [6/8] 0, 128
        %1253 = vxpose.xlu0.c.b16.cont [7/8] 0, 128
        %1254 = vxpose.xlu0.c.b16.end [8/8] 0, 128
        %v1255 = vpop.trf.xlu0
        %v1256 = vpop.trf.xlu0
        %v1257 = vpop.trf.xlu0
        %v1258 = vpop.trf.xlu0
        %v1259 = vpop.trf.xlu0
        %v1260 = vpop.trf.xlu0
        %v1261 = vpop.trf.xlu0
        %v1262 = vpop.trf.xlu0
        %v1263 = vrot.slane %v1207, 4
        %v1264 = vsel %vm550, %v1263, %v1143
        %v1266 = vunpack.c.l.s4 1983009808
        %v1267 = vunpack.c.0.s8 %v1266
        %v1268 = vperm.slane %v1264, %v1267
        %v1269 = vrot.slane %v1239, 4
        %v1270 = vsel %vm550, %v1269, %v1175
        %v1272 = vunpack.c.l.s4 1983009808
        %v1273 = vunpack.c.0.s8 %v1272
        %v1274 = vperm.slane %v1270, %v1273
        %v1275 = vrot.slane %v1274, 4
        %v1276 = vsel %vm550, %v1275, %v1268
        %v1277 = vrot.slane %v1268, 4
        %v1278 = vsel %vm550, %v1274, %v1277
        %v1280 = vunpack.c.l.s4 1934713408
        %v1281 = vunpack.c.0.s8 %v1280
        %v1282 = vperm.slane %v1276, %v1281
        %v1284 = vunpack.c.l.s4 1934713408
        %v1285 = vunpack.c.0.s8 %v1284
        %v1286 = vperm.slane %v1278, %v1285
        %v1287 = vrot.slane %v1282, 4
        %v1288 = vsel %vm550, 0, %v1287
        %v1289 = vrot.slane %v1286, 4
        %v1290 = vsel %vm550, 0, %v1289
        %v1291 = vrot.slane %v1223, 4
        %v1292 = vsel %vm550, %v1291, %v1159
        %v1294 = vunpack.c.l.s4 1983009808
        %v1295 = vunpack.c.0.s8 %v1294
        %v1296 = vperm.slane %v1292, %v1295
        %v1297 = vrot.slane %v1255, 4
        %v1298 = vsel %vm550, %v1297, %v1191
        %v1300 = vunpack.c.l.s4 1983009808
        %v1301 = vunpack.c.0.s8 %v1300
        %v1302 = vperm.slane %v1298, %v1301
        %v1303 = vrot.slane %v1302, 4
        %v1304 = vsel %vm550, %v1303, %v1296
        %v1305 = vrot.slane %v1296, 4
        %v1306 = vsel %vm550, %v1302, %v1305
        %v1308 = vunpack.c.l.s4 1934713408
        %v1309 = vunpack.c.0.s8 %v1308
        %v1310 = vperm.slane %v1304, %v1309
        %v1312 = vunpack.c.l.s4 1934713408
        %v1313 = vunpack.c.0.s8 %v1312
        %v1314 = vperm.slane %v1306, %v1313
        %v1315 = vrot.slane %v1310, 4
        %v1316 = vsel %vm550, 0, %v1315
        %v1317 = vrot.slane %v1314, 4
        %v1318 = vsel %vm550, 0, %v1317
        %v1321 = vpack.i.b16 %v1310, %v1282
        %v1323 = vshrl.u32 %v1282, 16
        %v1324 = vshrl.u32 %v1310, 16
        %v1325 = vpack.i.b16 %v1324, %v1323
        %v1329 = vpack.i.b16 %v1316, %v1288
        %v1331 = vshrl.u32 %v1288, 16
        %v1332 = vshrl.u32 %v1316, 16
        %v1333 = vpack.i.b16 %v1332, %v1331
        %v1337 = vpack.i.b16 %v1314, %v1286
        %v1339 = vshrl.u32 %v1286, 16
        %v1340 = vshrl.u32 %v1314, 16
        %v1341 = vpack.i.b16 %v1340, %v1339
        %v1345 = vpack.i.b16 %v1318, %v1290
        %v1347 = vshrl.u32 %v1290, 16
        %v1348 = vshrl.u32 %v1318, 16
        %v1349 = vpack.i.b16 %v1348, %v1347
        %1351 = vxpose.xlu0.c.b16.start [1/8] %v1321, 128
        %1352 = vxpose.xlu0.c.b16.cont [2/8] 0, 128
        %1353 = vxpose.xlu0.c.b16.cont [3/8] 0, 128
        %1354 = vxpose.xlu0.c.b16.cont [4/8] 0, 128
        %1355 = vxpose.xlu0.c.b16.cont [5/8] 0, 128
        %1356 = vxpose.xlu0.c.b16.cont [6/8] 0, 128
        %1357 = vxpose.xlu0.c.b16.cont [7/8] 0, 128
        %1358 = vxpose.xlu0.c.b16.end [8/8] 0, 128
        %v1359 = vpop.trf.xlu0
        %v1360 = vpop.trf.xlu0
        %v1361 = vpop.trf.xlu0
        %v1362 = vpop.trf.xlu0
        %v1363 = vpop.trf.xlu0
        %v1364 = vpop.trf.xlu0
        %v1365 = vpop.trf.xlu0
        %v1366 = vpop.trf.xlu0
        %1367 = vxpose.xlu0.c.b16.start [1/8] %v1325, 128
        %1368 = vxpose.xlu0.c.b16.cont [2/8] 0, 128
        %1369 = vxpose.xlu0.c.b16.cont [3/8] 0, 128
        %1370 = vxpose.xlu0.c.b16.cont [4/8] 0, 128
        %1371 = vxpose.xlu0.c.b16.cont [5/8] 0, 128
        %1372 = vxpose.xlu0.c.b16.cont [6/8] 0, 128
        %1373 = vxpose.xlu0.c.b16.cont [7/8] 0, 128
        %1374 = vxpose.xlu0.c.b16.end [8/8] 0, 128
        %v1375 = vpop.trf.xlu0
        %v1376 = vpop.trf.xlu0
        %v1377 = vpop.trf.xlu0
        %v1378 = vpop.trf.xlu0
        %v1379 = vpop.trf.xlu0
        %v1380 = vpop.trf.xlu0
        %v1381 = vpop.trf.xlu0
        %v1382 = vpop.trf.xlu0
        %1383 = vxpose.xlu0.c.b16.start [1/8] %v1329, 128
        %1384 = vxpose.xlu0.c.b16.cont [2/8] 0, 128
        %1385 = vxpose.xlu0.c.b16.cont [3/8] 0, 128
        %1386 = vxpose.xlu0.c.b16.cont [4/8] 0, 128
        %1387 = vxpose.xlu0.c.b16.cont [5/8] 0, 128
        %1388 = vxpose.xlu0.c.b16.cont [6/8] 0, 128
        %1389 = vxpose.xlu0.c.b16.cont [7/8] 0, 128
        %1390 = vxpose.xlu0.c.b16.end [8/8] 0, 128
        %v1391 = vpop.trf.xlu0
        %v1392 = vpop.trf.xlu0
        %v1393 = vpop.trf.xlu0
        %v1394 = vpop.trf.xlu0
        %v1395 = vpop.trf.xlu0
        %v1396 = vpop.trf.xlu0
        %v1397 = vpop.trf.xlu0
        %v1398 = vpop.trf.xlu0
        %1399 = vxpose.xlu0.c.b16.start [1/8] %v1333, 128
        %1400 = vxpose.xlu0.c.b16.cont [2/8] 0, 128
        %1401 = vxpose.xlu0.c.b16.cont [3/8] 0, 128
        %1402 = vxpose.xlu0.c.b16.cont [4/8] 0, 128
        %1403 = vxpose.xlu0.c.b16.cont [5/8] 0, 128
        %1404 = vxpose.xlu0.c.b16.cont [6/8] 0, 128
        %1405 = vxpose.xlu0.c.b16.cont [7/8] 0, 128
        %1406 = vxpose.xlu0.c.b16.end [8/8] 0, 128
        %v1407 = vpop.trf.xlu0
        %v1408 = vpop.trf.xlu0
        %v1409 = vpop.trf.xlu0
        %v1410 = vpop.trf.xlu0
        %v1411 = vpop.trf.xlu0
        %v1412 = vpop.trf.xlu0
        %v1413 = vpop.trf.xlu0
        %v1414 = vpop.trf.xlu0
        %1415 = vxpose.xlu0.c.b16.start [1/8] %v1337, 128
        %1416 = vxpose.xlu0.c.b16.cont [2/8] 0, 128
        %1417 = vxpose.xlu0.c.b16.cont [3/8] 0, 128
        %1418 = vxpose.xlu0.c.b16.cont [4/8] 0, 128
        %1419 = vxpose.xlu0.c.b16.cont [5/8] 0, 128
        %1420 = vxpose.xlu0.c.b16.cont [6/8] 0, 128
        %1421 = vxpose.xlu0.c.b16.cont [7/8] 0, 128
        %1422 = vxpose.xlu0.c.b16.end [8/8] 0, 128
        %v1423 = vpop.trf.xlu0
        %v1424 = vpop.trf.xlu0
        %v1425 = vpop.trf.xlu0
        %v1426 = vpop.trf.xlu0
        %v1427 = vpop.trf.xlu0
        %v1428 = vpop.trf.xlu0
        %v1429 = vpop.trf.xlu0
        %v1430 = vpop.trf.xlu0
        %1431 = vxpose.xlu0.c.b16.start [1/8] %v1341, 128
        %1432 = vxpose.xlu0.c.b16.cont [2/8] 0, 128
        %1433 = vxpose.xlu0.c.b16.cont [3/8] 0, 128
        %1434 = vxpose.xlu0.c.b16.cont [4/8] 0, 128
        %1435 = vxpose.xlu0.c.b16.cont [5/8] 0, 128
        %1436 = vxpose.xlu0.c.b16.cont [6/8] 0, 128
        %1437 = vxpose.xlu0.c.b16.cont [7/8] 0, 128
        %1438 = vxpose.xlu0.c.b16.end [8/8] 0, 128
        %v1439 = vpop.trf.xlu0
        %v1440 = vpop.trf.xlu0
        %v1441 = vpop.trf.xlu0
        %v1442 = vpop.trf.xlu0
        %v1443 = vpop.trf.xlu0
        %v1444 = vpop.trf.xlu0
        %v1445 = vpop.trf.xlu0
        %v1446 = vpop.trf.xlu0
        %1447 = vxpose.xlu0.c.b16.start [1/8] %v1345, 128
        %1448 = vxpose.xlu0.c.b16.cont [2/8] 0, 128
        %1449 = vxpose.xlu0.c.b16.cont [3/8] 0, 128
        %1450 = vxpose.xlu0.c.b16.cont [4/8] 0, 128
        %1451 = vxpose.xlu0.c.b16.cont [5/8] 0, 128
        %1452 = vxpose.xlu0.c.b16.cont [6/8] 0, 128
        %1453 = vxpose.xlu0.c.b16.cont [7/8] 0, 128
        %1454 = vxpose.xlu0.c.b16.end [8/8] 0, 128
        %v1455 = vpop.trf.xlu0
        %v1456 = vpop.trf.xlu0
        %v1457 = vpop.trf.xlu0
        %v1458 = vpop.trf.xlu0
        %v1459 = vpop.trf.xlu0
        %v1460 = vpop.trf.xlu0
        %v1461 = vpop.trf.xlu0
        %v1462 = vpop.trf.xlu0
        %1463 = vxpose.xlu0.c.b16.start [1/8] %v1349, 128
        %1464 = vxpose.xlu0.c.b16.cont [2/8] 0, 128
        %1465 = vxpose.xlu0.c.b16.cont [3/8] 0, 128
        %1466 = vxpose.xlu0.c.b16.cont [4/8] 0, 128
        %1467 = vxpose.xlu0.c.b16.cont [5/8] 0, 128
        %1468 = vxpose.xlu0.c.b16.cont [6/8] 0, 128
        %1469 = vxpose.xlu0.c.b16.cont [7/8] 0, 128
        %1470 = vxpose.xlu0.c.b16.end [8/8] 0, 128
        %v1471 = vpop.trf.xlu0
        %v1472 = vpop.trf.xlu0
        %v1473 = vpop.trf.xlu0
        %v1474 = vpop.trf.xlu0
        %v1475 = vpop.trf.xlu0
        %v1476 = vpop.trf.xlu0
        %v1477 = vpop.trf.xlu0
        %v1478 = vpop.trf.xlu0
        %v1479 = vrot.slane %v1423, 4
        %v1480 = vsel %vm550, %v1479, %v1359
        %v1482 = vunpack.c.l.s4 1983009808
        %v1483 = vunpack.c.0.s8 %v1482
        %v1484 = vperm.slane %v1480, %v1483
        %v1485 = vrot.slane %v1455, 4
        %v1486 = vsel %vm550, %v1485, %v1391
        %v1488 = vunpack.c.l.s4 1983009808
        %v1489 = vunpack.c.0.s8 %v1488
        %v1490 = vperm.slane %v1486, %v1489
        %v1491 = vrot.slane %v1490, 4
        %v1492 = vsel %vm550, %v1491, %v1484
        %v1494 = vunpack.c.l.s4 1934713408
        %v1495 = vunpack.c.0.s8 %v1494
        %v1496 = vperm.slane %v1492, %v1495
        %v1497 = vrot.slane %v1496, 4
        %v1498 = vsel %vm550, 0, %v1497
        %v1499 = vrot.slane %v1439, 4
        %v1500 = vsel %vm550, %v1499, %v1375
        %v1502 = vunpack.c.l.s4 1983009808
        %v1503 = vunpack.c.0.s8 %v1502
        %v1504 = vperm.slane %v1500, %v1503
        %v1505 = vrot.slane %v1471, 4
        %v1506 = vsel %vm550, %v1505, %v1407
        %v1508 = vunpack.c.l.s4 1983009808
        %v1509 = vunpack.c.0.s8 %v1508
        %v1510 = vperm.slane %v1506, %v1509
        %v1511 = vrot.slane %v1510, 4
        %v1512 = vsel %vm550, %v1511, %v1504
        %v1514 = vunpack.c.l.s4 1934713408
        %v1515 = vunpack.c.0.s8 %v1514
        %v1516 = vperm.slane %v1512, %v1515
        %v1517 = vrot.slane %v1516, 4
        %v1518 = vsel %vm550, 0, %v1517
        %v1521 = vpack.i.b16 %v1516, %v1496
        %v1522 = vshrl.u32 %v1496, 16
        %v1523 = vshrl.u32 %v1516, 16
        %v1524 = vpack.i.b16 %v1523, %v1522
        %v1527 = vpack.i.b16 %v1518, %v1498
        %v1528 = vshrl.u32 %v1498, 16
        %v1529 = vshrl.u32 %v1518, 16
        %v1530 = vpack.i.b16 %v1529, %v1528
        %v1532 = vsel %vm998, %v1521, 0
        %v1535 = vsel %vm998, %v1131, 0
        %1537 = vmatpush.bf16.xpose.msra.mxu0 0
        %1538 = vmatpush.bf16.xpose.msra.mxu0 0
        %1539 = vmatpush.bf16.xpose.msra.mxu0 0
        %1540 = vmatpush.bf16.xpose.msra.mxu0 0
        %1541 = vmatpush.bf16.xpose.msra.mxu0 0
        %1542 = vmatpush.bf16.xpose.msra.mxu0 0
        %1543 = vmatpush.bf16.xpose.msra.mxu0 0
        %1544 = vmatpush.bf16.xpose.msra.mxu0 %v1535
        %1545 = vmatmul.bf16.gmra.mxu0 %v1532
        %v1546 = vpop.f32.mrf.mxu0
        %v1547 = vadd.f32 0.0, %v1546
        %v1548 = vpop.f32.mrf.mxu0
        %1549 = vdwg.mxu0
        %v1551 = vsel %vm998, %v1524, 0
        %v1554 = vsel %vm998, %v1132, 0
        %1556 = vmatpush.bf16.xpose.msra.mxu0 0
        %1557 = vmatpush.bf16.xpose.msra.mxu0 0
        %1558 = vmatpush.bf16.xpose.msra.mxu0 0
        %1559 = vmatpush.bf16.xpose.msra.mxu0 0
        %1560 = vmatpush.bf16.xpose.msra.mxu0 0
        %1561 = vmatpush.bf16.xpose.msra.mxu0 0
        %1562 = vmatpush.bf16.xpose.msra.mxu0 0
        %1563 = vmatpush.bf16.xpose.msra.mxu0 %v1554
        %1564 = vmatmul.bf16.gmra.mxu0 %v1551
        %v1565 = vpop.f32.mrf.mxu0
        %v1566 = vadd.f32 0.0, %v1565
        %v1567 = vpop.f32.mrf.mxu0
        %1568 = vdwg.mxu0
        %v1570 = vsel %vm998, %v1527, 0
        %v1573 = vsel %vm998, %v1133, 0
        %1575 = vmatpush.bf16.xpose.msra.mxu0 0
        %1576 = vmatpush.bf16.xpose.msra.mxu0 0
        %1577 = vmatpush.bf16.xpose.msra.mxu0 0
        %1578 = vmatpush.bf16.xpose.msra.mxu0 0
        %1579 = vmatpush.bf16.xpose.msra.mxu0 0
        %1580 = vmatpush.bf16.xpose.msra.mxu0 0
        %1581 = vmatpush.bf16.xpose.msra.mxu0 0
        %1582 = vmatpush.bf16.xpose.msra.mxu0 %v1573
        %1583 = vmatmul.bf16.gmra.mxu0 %v1570
        %v1584 = vpop.f32.mrf.mxu0
        %v1585 = vadd.f32 0.0, %v1584
        %v1586 = vpop.f32.mrf.mxu0
        %1587 = vdwg.mxu0
        %v1589 = vsel %vm998, %v1530, 0
        %v1592 = vsel %vm998, %v1134, 0
        %1594 = vmatpush.bf16.xpose.msra.mxu0 0
        %1595 = vmatpush.bf16.xpose.msra.mxu0 0
        %1596 = vmatpush.bf16.xpose.msra.mxu0 0
        %1597 = vmatpush.bf16.xpose.msra.mxu0 0
        %1598 = vmatpush.bf16.xpose.msra.mxu0 0
        %1599 = vmatpush.bf16.xpose.msra.mxu0 0
        %1600 = vmatpush.bf16.xpose.msra.mxu0 0
        %1601 = vmatpush.bf16.xpose.msra.mxu0 %v1592
        %1602 = vmatmul.bf16.gmra.mxu0 %v1589
        %v1603 = vpop.f32.mrf.mxu0
        %v1604 = vadd.f32 0.0, %v1603
        %v1605 = vpop.f32.mrf.mxu0
        %1606 = vdwg.mxu0
        %1607 = vxpose.xlu0.b32.start [1/16] %v1547, 128
        %1608 = vxpose.xlu0.b32.cont [2/16] 0.0, 128
        %1609 = vxpose.xlu0.b32.cont [3/16] 0.0, 128
        %1610 = vxpose.xlu0.b32.cont [4/16] 0.0, 128
        %1611 = vxpose.xlu0.b32.cont [5/16] 0.0, 128
        %1612 = vxpose.xlu0.b32.cont [6/16] 0.0, 128
        %1613 = vxpose.xlu0.b32.cont [7/16] 0.0, 128
        %1614 = vxpose.xlu0.b32.cont [8/16] 0.0, 128
        %1615 = vxpose.xlu0.b32.cont [9/16] 0.0, 128
        %1616 = vxpose.xlu0.b32.cont [10/16] 0.0, 128
        %1617 = vxpose.xlu0.b32.cont [11/16] 0.0, 128
        %1618 = vxpose.xlu0.b32.cont [12/16] 0.0, 128
        %1619 = vxpose.xlu0.b32.cont [13/16] 0.0, 128
        %1620 = vxpose.xlu0.b32.cont [14/16] 0.0, 128
        %1621 = vxpose.xlu0.b32.cont [15/16] 0.0, 128
        %1622 = vxpose.xlu0.b32.end [16/16] 0.0, 128
        %v1623 = vpop.trf.xlu0
        %v1624 = vpop.trf.xlu0
        %v1625 = vpop.trf.xlu0
        %v1626 = vpop.trf.xlu0
        %v1627 = vpop.trf.xlu0
        %v1628 = vpop.trf.xlu0
        %v1629 = vpop.trf.xlu0
        %v1630 = vpop.trf.xlu0
        %v1631 = vpop.trf.xlu0
        %v1632 = vpop.trf.xlu0
        %v1633 = vpop.trf.xlu0
        %v1634 = vpop.trf.xlu0
        %v1635 = vpop.trf.xlu0
        %v1636 = vpop.trf.xlu0
        %v1637 = vpop.trf.xlu0
        %v1638 = vpop.trf.xlu0
        %1639 = vxpose.xlu0.b32.start [1/16] %v1566, 128
        %1640 = vxpose.xlu0.b32.cont [2/16] 0.0, 128
        %1641 = vxpose.xlu0.b32.cont [3/16] 0.0, 128
        %1642 = vxpose.xlu0.b32.cont [4/16] 0.0, 128
        %1643 = vxpose.xlu0.b32.cont [5/16] 0.0, 128
        %1644 = vxpose.xlu0.b32.cont [6/16] 0.0, 128
        %1645 = vxpose.xlu0.b32.cont [7/16] 0.0, 128
        %1646 = vxpose.xlu0.b32.cont [8/16] 0.0, 128
        %1647 = vxpose.xlu0.b32.cont [9/16] 0.0, 128
        %1648 = vxpose.xlu0.b32.cont [10/16] 0.0, 128
        %1649 = vxpose.xlu0.b32.cont [11/16] 0.0, 128
        %1650 = vxpose.xlu0.b32.cont [12/16] 0.0, 128
        %1651 = vxpose.xlu0.b32.cont [13/16] 0.0, 128
        %1652 = vxpose.xlu0.b32.cont [14/16] 0.0, 128
        %1653 = vxpose.xlu0.b32.cont [15/16] 0.0, 128
        %1654 = vxpose.xlu0.b32.end [16/16] 0.0, 128
        %v1655 = vpop.trf.xlu0
        %v1656 = vpop.trf.xlu0
        %v1657 = vpop.trf.xlu0
        %v1658 = vpop.trf.xlu0
        %v1659 = vpop.trf.xlu0
        %v1660 = vpop.trf.xlu0
        %v1661 = vpop.trf.xlu0
        %v1662 = vpop.trf.xlu0
        %v1663 = vpop.trf.xlu0
        %v1664 = vpop.trf.xlu0
        %v1665 = vpop.trf.xlu0
        %v1666 = vpop.trf.xlu0
        %v1667 = vpop.trf.xlu0
        %v1668 = vpop.trf.xlu0
        %v1669 = vpop.trf.xlu0
        %v1670 = vpop.trf.xlu0
        %1671 = vxpose.xlu0.b32.start [1/16] %v1585, 128
        %1672 = vxpose.xlu0.b32.cont [2/16] 0.0, 128
        %1673 = vxpose.xlu0.b32.cont [3/16] 0.0, 128
        %1674 = vxpose.xlu0.b32.cont [4/16] 0.0, 128
        %1675 = vxpose.xlu0.b32.cont [5/16] 0.0, 128
        %1676 = vxpose.xlu0.b32.cont [6/16] 0.0, 128
        %1677 = vxpose.xlu0.b32.cont [7/16] 0.0, 128
        %1678 = vxpose.xlu0.b32.cont [8/16] 0.0, 128
        %1679 = vxpose.xlu0.b32.cont [9/16] 0.0, 128
        %1680 = vxpose.xlu0.b32.cont [10/16] 0.0, 128
        %1681 = vxpose.xlu0.b32.cont [11/16] 0.0, 128
        %1682 = vxpose.xlu0.b32.cont [12/16] 0.0, 128
        %1683 = vxpose.xlu0.b32.cont [13/16] 0.0, 128
        %1684 = vxpose.xlu0.b32.cont [14/16] 0.0, 128
        %1685 = vxpose.xlu0.b32.cont [15/16] 0.0, 128
        %1686 = vxpose.xlu0.b32.end [16/16] 0.0, 128
        %v1687 = vpop.trf.xlu0
        %v1688 = vpop.trf.xlu0
        %v1689 = vpop.trf.xlu0
        %v1690 = vpop.trf.xlu0
        %v1691 = vpop.trf.xlu0
        %v1692 = vpop.trf.xlu0
        %v1693 = vpop.trf.xlu0
        %v1694 = vpop.trf.xlu0
        %v1695 = vpop.trf.xlu0
        %v1696 = vpop.trf.xlu0
        %v1697 = vpop.trf.xlu0
        %v1698 = vpop.trf.xlu0
        %v1699 = vpop.trf.xlu0
        %v1700 = vpop.trf.xlu0
        %v1701 = vpop.trf.xlu0
        %v1702 = vpop.trf.xlu0
        %1703 = vxpose.xlu0.b32.start [1/16] %v1604, 128
        %1704 = vxpose.xlu0.b32.cont [2/16] 0.0, 128
        %1705 = vxpose.xlu0.b32.cont [3/16] 0.0, 128
        %1706 = vxpose.xlu0.b32.cont [4/16] 0.0, 128
        %1707 = vxpose.xlu0.b32.cont [5/16] 0.0, 128
        %1708 = vxpose.xlu0.b32.cont [6/16] 0.0, 128
        %1709 = vxpose.xlu0.b32.cont [7/16] 0.0, 128
        %1710 = vxpose.xlu0.b32.cont [8/16] 0.0, 128
        %1711 = vxpose.xlu0.b32.cont [9/16] 0.0, 128
        %1712 = vxpose.xlu0.b32.cont [10/16] 0.0, 128
        %1713 = vxpose.xlu0.b32.cont [11/16] 0.0, 128
        %1714 = vxpose.xlu0.b32.cont [12/16] 0.0, 128
        %1715 = vxpose.xlu0.b32.cont [13/16] 0.0, 128
        %1716 = vxpose.xlu0.b32.cont [14/16] 0.0, 128
        %1717 = vxpose.xlu0.b32.cont [15/16] 0.0, 128
        %1718 = vxpose.xlu0.b32.end [16/16] 0.0, 128
        %v1719 = vpop.trf.xlu0
        %v1720 = vpop.trf.xlu0
        %v1721 = vpop.trf.xlu0
        %v1722 = vpop.trf.xlu0
        %v1723 = vpop.trf.xlu0
        %v1724 = vpop.trf.xlu0
        %v1725 = vpop.trf.xlu0
        %v1726 = vpop.trf.xlu0
        %v1727 = vpop.trf.xlu0
        %v1728 = vpop.trf.xlu0
        %v1729 = vpop.trf.xlu0
        %v1730 = vpop.trf.xlu0
        %v1731 = vpop.trf.xlu0
        %v1732 = vpop.trf.xlu0
        %v1733 = vpop.trf.xlu0
        %v1734 = vpop.trf.xlu0
        %v1735 = vrot.slane %v1687, 4
        %v1736 = vsel %vm326, %v1735, %v1623
        %v1737 = vrot.slane %v1623, 4
        %v1738 = vsel %vm326, %v1687, %v1737
        %v1740 = vunpack.c.l.s4 1983009808
        %v1741 = vunpack.c.0.s8 %v1740
        %v1742 = vperm.slane %v1736, %v1741
        %v1744 = vunpack.c.l.s4 1983009808
        %v1745 = vunpack.c.0.s8 %v1744
        %v1746 = vperm.slane %v1738, %v1745
        %v1747 = vrot.slane %v1719, 4
        %v1748 = vsel %vm326, %v1747, %v1655
        %v1749 = vrot.slane %v1655, 4
        %v1750 = vsel %vm326, %v1719, %v1749
        %v1752 = vunpack.c.l.s4 1983009808
        %v1753 = vunpack.c.0.s8 %v1752
        %v1754 = vperm.slane %v1748, %v1753
        %v1756 = vunpack.c.l.s4 1983009808
        %v1757 = vunpack.c.0.s8 %v1756
        %v1758 = vperm.slane %v1750, %v1757
        %v1759 = vrot.slane %v1754, 4
        %v1760 = vsel %vm326, %v1759, %v1742
        %v1761 = vrot.slane %v1742, 4
        %v1762 = vsel %vm326, %v1754, %v1761
        %v1764 = vunpack.c.l.s4 1934713408
        %v1765 = vunpack.c.0.s8 %v1764
        %v1766 = vperm.slane %v1760, %v1765
        %v1768 = vunpack.c.l.s4 1934713408
        %v1769 = vunpack.c.0.s8 %v1768
        %v1770 = vperm.slane %v1762, %v1769
        %v1771 = vrot.slane %v1758, 4
        %v1772 = vsel %vm326, %v1771, %v1746
        %v1773 = vrot.slane %v1746, 4
        %v1774 = vsel %vm326, %v1758, %v1773
        %v1776 = vunpack.c.l.s4 1934713408
        %v1777 = vunpack.c.0.s8 %v1776
        %v1778 = vperm.slane %v1772, %v1777
        %v1780 = vunpack.c.l.s4 1934713408
        %v1781 = vunpack.c.0.s8 %v1780
        %v1782 = vperm.slane %v1774, %v1781
        %v1783 = vrot.slane %v1766, 4
        %v1784 = vsel %vm326, 0.0, %v1783
        %v1785 = vrot.slane %v1770, 4
        %v1786 = vsel %vm326, 0.0, %v1785
        %v1787 = vrot.slane %v1778, 4
        %v1788 = vsel %vm326, 0.0, %v1787
        %v1789 = vrot.slane %v1782, 4
        %v1790 = vsel %vm326, 0.0, %v1789
        %v1791 = vsel %vm326, %v1785, %v1766
        %v1793 = vunpack.c.l.s4 1983009808
        %v1794 = vunpack.c.0.s8 %v1793
        %v1795 = vperm.slane %v1791, %v1794
        %v1796 = vrot.slane %v1786, 4
        %v1797 = vsel %vm326, %v1796, %v1784
        %v1799 = vunpack.c.l.s4 1983009808
        %v1800 = vunpack.c.0.s8 %v1799
        %v1801 = vperm.slane %v1797, %v1800
        %v1802 = vsel %vm326, %v1789, %v1778
        %v1804 = vunpack.c.l.s4 1983009808
        %v1805 = vunpack.c.0.s8 %v1804
        %v1806 = vperm.slane %v1802, %v1805
        %v1807 = vrot.slane %v1790, 4
        %v1808 = vsel %vm326, %v1807, %v1788
        %v1810 = vunpack.c.l.s4 1983009808
        %v1811 = vunpack.c.0.s8 %v1810
        %v1812 = vperm.slane %v1808, %v1811
        %v1813 = vrot.slane %v1801, 4
        %v1814 = vsel %vm326, %v1813, %v1795
        %v1815 = vrot.slane %v1795, 4
        %v1816 = vsel %vm326, %v1801, %v1815
        %v1818 = vunpack.c.l.s4 1934713408
        %v1819 = vunpack.c.0.s8 %v1818
        %v1820 = vperm.slane %v1814, %v1819
        %v1822 = vunpack.c.l.s4 1934713408
        %v1823 = vunpack.c.0.s8 %v1822
        %v1824 = vperm.slane %v1816, %v1823
        %v1825 = vrot.slane %v1812, 4
        %v1826 = vsel %vm326, %v1825, %v1806
        %v1827 = vrot.slane %v1806, 4
        %v1828 = vsel %vm326, %v1812, %v1827
        %v1830 = vunpack.c.l.s4 1934713408
        %v1831 = vunpack.c.0.s8 %v1830
        %v1832 = vperm.slane %v1826, %v1831
        %v1834 = vunpack.c.l.s4 1934713408
        %v1835 = vunpack.c.0.s8 %v1834
        %v1836 = vperm.slane %v1828, %v1835
        %v1837 = vrot.slane %v1832, 4
        %v1838 = vsel %vm326, %v1837, %v1820
        %v1839 = vrot.slane %v1820, 4
        %v1840 = vsel %vm326, %v1832, %v1839
        %v1841 = vrot.slane %v1836, 4
        %v1842 = vsel %vm326, %v1841, %v1824
        %v1843 = vrot.slane %v1824, 4
        %v1844 = vsel %vm326, %v1836, %v1843
        %1846 = vrot.lane.b32.xlu0 %v1840, 8
        %v1847 = vpop.permute.xlu0 %1846
        %1850 = vrot.lane.b32.xlu0 %v1842, 16
        %v1851 = vpop.permute.xlu0 %1850
        %1854 = vrot.lane.b32.xlu0 %v1844, 24
        %v1855 = vpop.permute.xlu0 %1854
        %v1857 = vsel %vm998, %v1838, %v1847
        %vm1858 = vcmask 130048
        %v1859 = vsel %vm1858, %v1857, %v1851
        %vm1860 = vcmask 195584
        %v1861 = vsel %vm1860, %v1859, %v1855
        %v1862 = vpack.c.bf16 %v1861, %v1861
        %v1863 = vld [vmem:[#allocation7] sm:$0xf]
        %v1864 = vld [vmem:[#allocation7 + $0x4] sm:$0xf]
        %v1865 = vld [vmem:[#allocation7 + $0x8] sm:$0xf]
        %v1866 = vld [vmem:[#allocation7 + $0xc] sm:$0xf]
        %v1867 = vld [vmem:[%s4] sm:$0x1]
        %v1869 = vperm.slane %v1867, 0
        %v1875 = vunpack.c.l.b16 %v1863
        %v1876 = vunpack.c.l.b16 %v1864
        %v1877 = vunpack.c.l.b16 %v1865
        %v1878 = vunpack.c.l.b16 %v1866
        %v1879 = vpack.c.b16 %v1876, %v1875
        %v1880 = vpack.c.b16 %v1878, %v1877
        %v1884 = vsel %vm297, %v1862, 0
        %1886 = vmatpush.bf16.msra.mxu0 0
        %1887 = vmatpush.bf16.msra.mxu0 0
        %1888 = vmatpush.bf16.msra.mxu0 0
        %1889 = vmatpush.bf16.msra.mxu0 0
        %1890 = vmatpush.bf16.msra.mxu0 0
        %1891 = vmatpush.bf16.msra.mxu0 0
        %1892 = vmatpush.bf16.msra.mxu0 %v1880
        %1893 = vmatpush.bf16.msra.mxu0 %v1879
        %1894 = vmatmul.bf16.gmra.mxu0 %v1884
        %v1895 = vpop.f32.mrf.mxu0
        %v1896 = vadd.f32 %v1869, %v1895
        %v1897 = vpop.f32.mrf.mxu0
        %1898 = vdwg.mxu0
        %1899 = vst.msk [vmem:[%s274] sm:$0xff] %vm297, %v1896
        %s1900 = sand.u32 %s141, 1
        %s1901 = scalar_lea.sflag [#allocation4], %s1900
        %s1902 = sand.u32 %s141, 1
        %s1903 = smul.addr %s1902, 8
        %s1904 = scalar_lea.vmem [#allocation8], %s1903
        // Predicated region
        $region53: #{tpu_custom_call.1} parent=39 // pred_check
          %p1905 = pneg %p151
        $region54: #{tpu_custom_call.1} parent=39 // pred_check_branch
          %1907 = sbr.rel (%p1905) target = $region56
        $region55: #{tpu_custom_call.1} parent=39 // pred_region
          %1909 = vsyncadd %s1901, 0
          %s1910 = smul.addr %s23, 8
          %s1911 = scalar_lea.hbm %s5, %s1910
          %s1913 = sshll.u32 %s1904, 4
          %s1914 = int_to_ptr.vmem [resolvable:$true] %s1913
          %s1915 = sshll.u32 %s1911, 4
          %s1916 = int_to_ptr.hbm [resolvable:$true] %s1915
          %1918 = dma.vmem_to_hbm [thread:$0]  %s1914, 128, %s1916, %s1901
        $region56: #{tpu_custom_call.1} parent=39 // pred_fallthru
          _
      $region40: #{tpu_custom_call.1} parent=5 // pred_fallthru
        _
      %p1919 = scmp.le.s32.totalorder 2, %s18
      // Predicated region
      $region57: #{tpu_custom_call.1} parent=5 // pred_check
        %p1920 = pneg %p1919
      $region58: #{tpu_custom_call.1} parent=5 // pred_check_branch
        %1922 = sbr.rel (%p1920) target = $region60
      $region59: #{tpu_custom_call.1} parent=5 // pred_region
        %s1923 = ssub.s32 %s18, 2
        // Predicated region
        $region61: #{tpu_custom_call.1} parent=59 // pred_check
          %p1924 = pneg %p157
        $region62: #{tpu_custom_call.1} parent=59 // pred_check_branch
          %1926 = sbr.rel (%p1924) target = $region64
        $region63: #{tpu_custom_call.1} parent=59 // pred_region
          %s1927 = sand.u32 %s142, 1
          %s1928 = scalar_lea.sflag [#allocation4], %s1927
          %s1929 = sand.u32 %s142, 1
          %s1930 = smul.addr %s1929, 8
          %s1931 = scalar_lea.vmem [#allocation8], %s1930
          %1933 = dma.done %s1928, 128
        $region64: #{tpu_custom_call.1} parent=59 // pred_fallthru
          _
      $region60: #{tpu_custom_call.1} parent=5 // pred_fallthru
        _
    $region6: #{tpu_custom_call.1} parent=1 // loop_footer
      %s22 = sadd.s32 1, %s18
    $region7: #{tpu_custom_call.1} parent=1 // loop_footer_branch
      %17 = sbr.rel target = $region3
    $region8: #{tpu_custom_call.1} parent=1 // loop_exit
      _
    %1934 = vsyncpa [#allocation3], 1
    %s1935 = scalar_lea.sflag [#allocation3], 1
    %1936 = vsyncpa %s1935, 1
    %1937 = vsyncpa [#allocation6], 1
    %1938 = vsyncpa [#allocation4], 1
    %s1939 = scalar_lea.sflag [#allocation4], 1
    %1940 = vsyncpa %s1939, 1

</llo_original>
